<compile_context>
chip_gen: v7x
topology: tpu7x:2x2x1
jax: 0.10.0
libtpu: 0.0.40
codegen_flags: <defaults>
</compile_context>

<pallas_src>
import jax
import jax.numpy as jnp
from jax.experimental import pallas as pl
from jax.experimental.pallas import tpu as pltpu


def _round_up(x, m):
    return (x + m - 1) // m * m


def _choose_k_tile(flat):
    # K-tile the fc1 weight once it is big enough to threaten v7x's 64 MiB
    # VMEM (w1 is flat x flat/2 bf16, double-buffered when K-tiled).
    if flat <= 2048:
        return flat
    for tk in (2048, 1024, 512, 256, 128):
        if flat % tk == 0:
            return tk
    return flat


def _device_tuning():
    """(batch_tile, vmem_limit_bytes) per TPU generation."""
    kind = jax.devices()[0].device_kind.lower()
    if "v7" in kind or "7x" in kind:
        # 64 MiB physical VMEM: leave headroom for compiler internal scratch.
        return 256, 40 * 1024 * 1024
    if "v5" in kind:
        # 128x128 MXU saturates at M=128; 128 MiB VMEM.
        return 128, 96 * 1024 * 1024
    # v6e (and default): 256-tall MXU, 128 MiB VMEM.
    return 256, 96 * 1024 * 1024


def fcnn_kernel(x_ref, w1_ref, b1_ref, w2_ref, b2_ref, w3_ref, b3_ref,
                w4_ref, b4_ref, o_ref, acc_ref):
    """Grid = (batch tiles, fc1 K tiles).  fc1 accumulates in an f32 VMEM
    scratch across the trailing 'arbitrary' K axis; fc2..fc4 + sigmoid run
    once on the last K step.  All matmuls: bf16 x bf16 -> f32 on the MXU."""
    k = pl.program_id(1)

    @pl.when(k == 0)
    def _():
        acc_ref[...] = jnp.zeros_like(acc_ref)

    # fc1 partial product for this K slab.
    acc_ref[...] += jnp.dot(x_ref[...], w1_ref[...],
                            preferred_element_type=jnp.float32)

    @pl.when(k == pl.num_programs(1) - 1)
    def _():
        h = jnp.maximum(acc_ref[...] + b1_ref[...], 0.0)              # fc1+ReLU
        h = jnp.dot(h.astype(jnp.bfloat16), w2_ref[...],
                    preferred_element_type=jnp.float32)
        h = jnp.maximum(h + b2_ref[...], 0.0)                         # fc2+ReLU
        h = jnp.dot(h.astype(jnp.bfloat16), w3_ref[...],
                    preferred_element_type=jnp.float32)
        h = jnp.maximum(h + b3_ref[...], 0.0)                         # fc3+ReLU
        z = jnp.dot(h.astype(jnp.bfloat16), w4_ref[...],
                    preferred_element_type=jnp.float32) + b4_ref[...]  # fc4
        # sigmoid = 1 / (1 + exp(-z)); exp and reciprocal both route to the EUP.
        o_ref[...] = pl.reciprocal(1.0 + jnp.exp(-z), approx=True)


def init_linear(key, fan_in, fan_out):
    """PyTorch nn.Linear default init: U(-1/sqrt(fan_in), 1/sqrt(fan_in))."""
    kw, kb = jax.random.split(key)
    bound = 1.0 / jnp.sqrt(jnp.float32(fan_in))
    w = jax.random.uniform(kw, (fan_in, fan_out), jnp.float32, -bound, bound)
    b = jax.random.uniform(kb, (1, fan_out), jnp.float32, -bound, bound)
    return w, b


def make_params(N, L, key):
    flat = N * L
    k1, k2, k3, k4 = jax.random.split(key, 4)
    w1, b1 = init_linear(k1, flat, flat // 2)
    w2, b2 = init_linear(k2, flat // 2, flat // 4)
    # see TODO(synk) at top: in_features chosen to match the forward chain.
    w3, b3 = init_linear(k3, flat // 4, flat // 256)
    w4, b4 = init_linear(k4, flat // 256, L)
    return (w1, b1, w2, b2, w3, b3, w4, b4)


def prepare_params(params):
    """One-time cast of weights to bf16 for the MXU stream (biases stay f32).
    Call once at model-load time -- NOT per forward call."""
    w1, b1, w2, b2, w3, b3, w4, b4 = params
    return (w1.astype(jnp.bfloat16), b1,
            w2.astype(jnp.bfloat16), b2,
            w3.astype(jnp.bfloat16), b3,
            w4.astype(jnp.bfloat16), b4)


def fcnn_forward(x, params, *, batch_tile=None, vmem_limit_bytes=None):
    w1, b1, w2, b2, w3, b3, w4, b4 = params
    assert w1.dtype == jnp.bfloat16, "pass prepare_params() output (bf16 weights)"
    B = x.shape[0]
    flat = w1.shape[0]
    L = w4.shape[1]
    d1, d2, d3 = w1.shape[1], w2.shape[1], w3.shape[1]

    tb_default, vmem_default = _device_tuning()
    if batch_tile is None:
        batch_tile = tb_default
    if vmem_limit_bytes is None:
        vmem_limit_bytes = vmem_default

    # nn.Flatten(start_dim=1); bf16 MXU input stream (x is per-call data, so
    # this cast is not the repeated weight-recast the review flagged).
    xf = x.reshape(B, -1).astype(jnp.bfloat16)
    assert xf.shape[1] == flat

    # Batch tile: at least 16 rows (bf16 (16,128) min tile on the sublane
    # axis), up to 128/256 depending on generation.  Pad batch, slice after.
    tb = min(batch_tile, _round_up(B, 16))
    b_pad = _round_up(B, tb)
    if b_pad != B:
        xf = jnp.pad(xf, ((0, b_pad - B), (0, 0)))

    tk = _choose_k_tile(flat)
    k_tiles = flat // tk
    grid = (b_pad // tb, k_tiles)
    # TODO(synk): with tiny B the batch grid is 1, so "parallel" cannot use
    # v7x's 2nd TensorCore and the whole weight DMA sits on the critical path;
    # batch >= 2*tb rows per call (or cross-call weight prefetch, P10) to
    # amortize the weight stream in a serving loop.

    resident = pl.Buffered(1)   # constant-index blocks: skip the double buffer
    if k_tiles > 1:
        # K slabs change per step -> keep default double buffering for overlap.
        w1_spec = pl.BlockSpec((tk, d1), lambda i, k: (k, 0))
    else:
        w1_spec = pl.BlockSpec((tk, d1), lambda i, k: (0, 0),
                               pipeline_mode=resident)

    in_specs = [
        pl.BlockSpec((tb, tk), lambda i, k: (i, k)),                 # x tile
        w1_spec,
        pl.BlockSpec(b1.shape, lambda i, k: (0, 0), pipeline_mode=resident),
        pl.BlockSpec(w2.shape, lambda i, k: (0, 0), pipeline_mode=resident),
        pl.BlockSpec(b2.shape, lambda i, k: (0, 0), pipeline_mode=resident),
        pl.BlockSpec(w3.shape, lambda i, k: (0, 0), pipeline_mode=resident),
        pl.BlockSpec(b3.shape, lambda i, k: (0, 0), pipeline_mode=resident),
        pl.BlockSpec(w4.shape, lambda i, k: (0, 0), pipeline_mode=resident),
        pl.BlockSpec(b4.shape, lambda i, k: (0, 0), pipeline_mode=resident),
    ]

    flops = 2 * b_pad * (flat * d1 + d1 * d2 + d2 * d3 + d3 * L)
    bytes_accessed = (xf.size * 2 + b_pad * L * 4
                      + sum(w.size * 2 for w in (w1, w2, w3, w4))
                      + sum(b.size * 4 for b in (b1, b2, b3, b4)))

    out = pl.pallas_call(
        fcnn_kernel,
        out_shape=jax.ShapeDtypeStruct((b_pad, L), jnp.float32),
        grid=grid,
        in_specs=in_specs,
        out_specs=pl.BlockSpec((tb, L), lambda i, k: (i, 0)),
        scratch_shapes=[pltpu.VMEM((tb, d1), jnp.float32)],   # fc1 accumulator
        compiler_params=pltpu.CompilerParams(
            dimension_semantics=("parallel", "arbitrary"),
            vmem_limit_bytes=vmem_limit_bytes),
        cost_estimate=pl.CostEstimate(
            flops=flops,
            transcendentals=b_pad * L,
            bytes_accessed=bytes_accessed),
    )(xf, w1, b1, w2, b2, w3, b3, w4, b4)
    return out[:B]


def fcnn_reference(x, params):
    """Pure-JAX f32 reference with the original module's math."""
    w1, b1, w2, b2, w3, b3, w4, b4 = params
    h = x.reshape(x.shape[0], -1).astype(jnp.float32)
    h = jnp.maximum(h @ w1 + b1, 0.0)
    h = jnp.maximum(h @ w2 + b2, 0.0)
    h = jnp.maximum(h @ w3 + b3, 0.0)
    return jax.nn.sigmoid(h @ w4 + b4)


if __name__ == "__main__":
    N, L, B = 32, 32, 8          # flat_size = 1024 -> widths 512/256/4 -> L
    key = jax.random.PRNGKey(0)
    kx, kp = jax.random.split(key)
    x = jax.random.normal(kx, (B, N, L), jnp.float32)

    params_f32 = make_params(N, L, kp)
    params = prepare_params(params_f32)        # one-time bf16 weight cast

    fwd = jax.jit(fcnn_forward)
    out = jax.block_until_ready(fwd(x, params))

    ref = fcnn_reference(x, params_f32)
    assert out.shape == (B, L), out.shape
    # bf16 weight/activation stream + approx reciprocal -> looser tolerance
    # than the pure-f32 path.
    assert jnp.allclose(out, ref, atol=2e-2, rtol=2e-2), "mismatch vs JAX reference"
    print("KERNEL_OK")
</pallas_src>

<mosaic_0001>
module attributes {stable_mosaic.version = 11 : i64} {
  func.func @fcnn_kernel(%arg0: i32, %arg1: i32, %arg2: memref<16x1024xbf16, #tpu.memory_space<vmem>>, %arg3: memref<1024x512xbf16, #tpu.memory_space<vmem>>, %arg4: memref<1x512xf32, #tpu.memory_space<vmem>>, %arg5: memref<512x256xbf16, #tpu.memory_space<vmem>>, %arg6: memref<1x256xf32, #tpu.memory_space<vmem>>, %arg7: memref<256x4xbf16, #tpu.memory_space<vmem>>, %arg8: memref<1x4xf32, #tpu.memory_space<vmem>>, %arg9: memref<4x32xbf16, #tpu.memory_space<vmem>>, %arg10: memref<1x32xf32, #tpu.memory_space<vmem>>, %arg11: memref<16x32xf32, #tpu.memory_space<vmem>>, %arg12: memref<16x512xf32, #tpu.memory_space<vmem>>) attributes {dimension_semantics = [#tpu.dimension_semantics<parallel>, #tpu.dimension_semantics<arbitrary>], iteration_bounds = array<i64: 1, 1>, scalar_prefetch = 0 : i64, scratch_operands = 1 : i64, tpu.core_type = #tpu.core_type<tc>, window_params = [{transform_indices = @transform_0, window_bounds = array<i64: 16, 1024>}, {pipeline_mode = #tpu.pipeline_mode<synchronous>, transform_indices = @transform_1, window_bounds = array<i64: 1024, 512>}, {pipeline_mode = #tpu.pipeline_mode<synchronous>, transform_indices = @transform_2, window_bounds = array<i64: 1, 512>}, {pipeline_mode = #tpu.pipeline_mode<synchronous>, transform_indices = @transform_3, window_bounds = array<i64: 512, 256>}, {pipeline_mode = #tpu.pipeline_mode<synchronous>, transform_indices = @transform_4, window_bounds = array<i64: 1, 256>}, {pipeline_mode = #tpu.pipeline_mode<synchronous>, transform_indices = @transform_5, window_bounds = array<i64: 256, 4>}, {pipeline_mode = #tpu.pipeline_mode<synchronous>, transform_indices = @transform_6, window_bounds = array<i64: 1, 4>}, {pipeline_mode = #tpu.pipeline_mode<synchronous>, transform_indices = @transform_7, window_bounds = array<i64: 4, 32>}, {pipeline_mode = #tpu.pipeline_mode<synchronous>, transform_indices = @transform_8, window_bounds = array<i64: 1, 32>}, {transform_indices = @transform_9, window_bounds = array<i64: 16, 32>}]} {
    %c0_i32 = arith.constant 0 : i32
    %0 = arith.cmpi eq, %arg1, %c0_i32 : i32
    %1 = arith.extui %0 : i1 to i32
    %c0_i32_0 = arith.constant 0 : i32
    %2 = arith.cmpi ne, %1, %c0_i32_0 : i32
    scf.if %2 {
      %cst_10 = arith.constant 0.000000e+00 : f32
      %12 = vector.broadcast %cst_10 : f32 to vector<16x512xf32>
      %c0_11 = arith.constant 0 : index
      %c0_12 = arith.constant 0 : index
      %13 = vector.load %arg12[%c0_11, %c0_12] : memref<16x512xf32, #tpu.memory_space<vmem>>, vector<16x512xf32>
      tpu.vector_store %arg12[%c0_11, %c0_12], %12 {strides = array<i32>} : memref<16x512xf32, #tpu.memory_space<vmem>>, vector<16x512xf32>,
    } else {
    }
    %c0 = arith.constant 0 : index
    %c0_1 = arith.constant 0 : index
    %3 = vector.load %arg12[%c0, %c0_1] : memref<16x512xf32, #tpu.memory_space<vmem>>, vector<16x512xf32>
    %c0_2 = arith.constant 0 : index
    %c0_3 = arith.constant 0 : index
    %4 = vector.load %arg2[%c0_2, %c0_3] : memref<16x1024xbf16, #tpu.memory_space<vmem>>, vector<16x1024xbf16>
    %c0_4 = arith.constant 0 : index
    %c0_5 = arith.constant 0 : index
    %5 = vector.load %arg3[%c0_4, %c0_5] : memref<1024x512xbf16, #tpu.memory_space<vmem>>, vector<1024x512xbf16>
    %cst = arith.constant dense<0.000000e+00> : vector<16x512xf32>
    %6 = tpu.matmul %4, %5, %cst {dimension_numbers = #tpu.dot_dimension_numbers<[1], [0], [0], [1], [0, 0, 1, 1], [], []>} : vector<16x1024xbf16>, vector<1024x512xbf16>, vector<16x512xf32> -> vector<16x512xf32>
    %7 = arith.addf %3, %6 : vector<16x512xf32>
    %c0_6 = arith.constant 0 : index
    %c0_7 = arith.constant 0 : index
    %8 = vector.load %arg12[%c0_6, %c0_7] : memref<16x512xf32, #tpu.memory_space<vmem>>, vector<16x512xf32>
    tpu.vector_store %arg12[%c0_6, %c0_7], %7 {strides = array<i32>} : memref<16x512xf32, #tpu.memory_space<vmem>>, vector<16x512xf32>,
    %c0_i32_8 = arith.constant 0 : i32
    %9 = arith.cmpi eq, %arg1, %c0_i32_8 : i32
    %10 = arith.extui %9 : i1 to i32
    %c0_i32_9 = arith.constant 0 : i32
    %11 = arith.cmpi ne, %10, %c0_i32_9 : i32
    scf.if %11 {
      %c0_10 = arith.constant 0 : index
      %c0_11 = arith.constant 0 : index
      %12 = vector.load %arg12[%c0_10, %c0_11] : memref<16x512xf32, #tpu.memory_space<vmem>>, vector<16x512xf32>
      %c0_12 = arith.constant 0 : index
      %c0_13 = arith.constant 0 : index
      %13 = vector.load %arg4[%c0_12, %c0_13] : memref<1x512xf32, #tpu.memory_space<vmem>>, vector<1x512xf32>
      %14 = vector.broadcast %13 : vector<1x512xf32> to vector<16x512xf32>
      %15 = arith.addf %12, %14 : vector<16x512xf32>
      %cst_14 = arith.constant 0.000000e+00 : f32
      %16 = vector.broadcast %cst_14 : f32 to vector<16x512xf32>
      %17 = arith.maximumf %15, %16 : vector<16x512xf32>
      %18 = arith.truncf %17 : vector<16x512xf32> to vector<16x512xbf16>
      %c0_15 = arith.constant 0 : index
      %c0_16 = arith.constant 0 : index
      %19 = vector.load %arg5[%c0_15, %c0_16] : memref<512x256xbf16, #tpu.memory_space<vmem>>, vector<512x256xbf16>
      %cst_17 = arith.constant dense<0.000000e+00> : vector<16x256xf32>
      %20 = tpu.matmul %18, %19, %cst_17 {dimension_numbers = #tpu.dot_dimension_numbers<[1], [0], [0], [1], [0, 0, 1, 1], [], []>} : vector<16x512xbf16>, vector<512x256xbf16>, vector<16x256xf32> -> vector<16x256xf32>
      %c0_18 = arith.constant 0 : index
      %c0_19 = arith.constant 0 : index
      %21 = vector.load %arg6[%c0_18, %c0_19] : memref<1x256xf32, #tpu.memory_space<vmem>>, vector<1x256xf32>
      %22 = vector.broadcast %21 : vector<1x256xf32> to vector<16x256xf32>
      %23 = arith.addf %20, %22 : vector<16x256xf32>
      %cst_20 = arith.constant 0.000000e+00 : f32
      %24 = vector.broadcast %cst_20 : f32 to vector<16x256xf32>
      %25 = arith.maximumf %23, %24 : vector<16x256xf32>
      %26 = arith.truncf %25 : vector<16x256xf32> to vector<16x256xbf16>
      %c0_21 = arith.constant 0 : index
      %c0_22 = arith.constant 0 : index
      %27 = vector.load %arg7[%c0_21, %c0_22] : memref<256x4xbf16, #tpu.memory_space<vmem>>, vector<256x4xbf16>
      %cst_23 = arith.constant dense<0.000000e+00> : vector<16x4xf32>
      %28 = tpu.matmul %26, %27, %cst_23 {dimension_numbers = #tpu.dot_dimension_numbers<[1], [0], [0], [1], [0, 0, 1, 1], [], []>} : vector<16x256xbf16>, vector<256x4xbf16>, vector<16x4xf32> -> vector<16x4xf32>
      %c0_24 = arith.constant 0 : index
      %c0_25 = arith.constant 0 : index
      %29 = vector.load %arg8[%c0_24, %c0_25] : memref<1x4xf32, #tpu.memory_space<vmem>>, vector<1x4xf32>
      %30 = vector.broadcast %29 : vector<1x4xf32> to vector<16x4xf32>
      %31 = arith.addf %28, %30 : vector<16x4xf32>
      %cst_26 = arith.constant 0.000000e+00 : f32
      %32 = vector.broadcast %cst_26 : f32 to vector<16x4xf32>
      %33 = arith.maximumf %31, %32 : vector<16x4xf32>
      %34 = arith.truncf %33 : vector<16x4xf32> to vector<16x4xbf16>
      %c0_27 = arith.constant 0 : index
      %c0_28 = arith.constant 0 : index
      %35 = vector.load %arg9[%c0_27, %c0_28] : memref<4x32xbf16, #tpu.memory_space<vmem>>, vector<4x32xbf16>
      %cst_29 = arith.constant dense<0.000000e+00> : vector<16x32xf32>
      %36 = tpu.matmul %34, %35, %cst_29 {dimension_numbers = #tpu.dot_dimension_numbers<[1], [0], [0], [1], [0, 0, 1, 1], [], []>} : vector<16x4xbf16>, vector<4x32xbf16>, vector<16x32xf32> -> vector<16x32xf32>
      %c0_30 = arith.constant 0 : index
      %c0_31 = arith.constant 0 : index
      %37 = vector.load %arg10[%c0_30, %c0_31] : memref<1x32xf32, #tpu.memory_space<vmem>>, vector<1x32xf32>
      %38 = vector.broadcast %37 : vector<1x32xf32> to vector<16x32xf32>
      %39 = arith.addf %36, %38 : vector<16x32xf32>
      %cst_32 = arith.constant 0.000000e+00 : f32
      %40 = vector.broadcast %cst_32 : f32 to vector<16x32xf32>
      %41 = arith.subf %40, %39 : vector<16x32xf32>
      %42 = math.exp %41 : vector<16x32xf32>
      %cst_33 = arith.constant 1.000000e+00 : f32
      %43 = vector.broadcast %cst_33 : f32 to vector<16x32xf32>
      %44 = arith.addf %43, %42 : vector<16x32xf32>
      %45 = tpu.reciprocal %44 {approx = true} : vector<16x32xf32> -> vector<16x32xf32>
      %c0_34 = arith.constant 0 : index
      %c0_35 = arith.constant 0 : index
      %46 = vector.load %arg11[%c0_34, %c0_35] : memref<16x32xf32, #tpu.memory_space<vmem>>, vector<16x32xf32>
      tpu.vector_store %arg11[%c0_34, %c0_35], %45 {strides = array<i32>} : memref<16x32xf32, #tpu.memory_space<vmem>>, vector<16x32xf32>,
    } else {
    }
    return
  }
  func.func @transform_0(%arg0: i32, %arg1: i32) -> (i32, i32) {
    %c0_i32 = arith.constant 0 : i32
    return %arg0, %arg1 : i32, i32
  }
  func.func @transform_1(%arg0: i32, %arg1: i32) -> (i32, i32) {
    %c0_i32 = arith.constant 0 : i32
    %c0_i32_0 = arith.constant 0 : i32
    %c0_i32_1 = arith.constant 0 : i32
    return %c0_i32, %c0_i32_0 : i32, i32
  }
  func.func @transform_2(%arg0: i32, %arg1: i32) -> (i32, i32) {
    %c0_i32 = arith.constant 0 : i32
    %c0_i32_0 = arith.constant 0 : i32
    %c0_i32_1 = arith.constant 0 : i32
    return %c0_i32, %c0_i32_0 : i32, i32
  }
  func.func @transform_3(%arg0: i32, %arg1: i32) -> (i32, i32) {
    %c0_i32 = arith.constant 0 : i32
    %c0_i32_0 = arith.constant 0 : i32
    %c0_i32_1 = arith.constant 0 : i32
    return %c0_i32, %c0_i32_0 : i32, i32
  }
  func.func @transform_4(%arg0: i32, %arg1: i32) -> (i32, i32) {
    %c0_i32 = arith.constant 0 : i32
    %c0_i32_0 = arith.constant 0 : i32
    %c0_i32_1 = arith.constant 0 : i32
    return %c0_i32, %c0_i32_0 : i32, i32
  }
  func.func @transform_5(%arg0: i32, %arg1: i32) -> (i32, i32) {
    %c0_i32 = arith.constant 0 : i32
    %c0_i32_0 = arith.constant 0 : i32
    %c0_i32_1 = arith.constant 0 : i32
    return %c0_i32, %c0_i32_0 : i32, i32
  }
  func.func @transform_6(%arg0: i32, %arg1: i32) -> (i32, i32) {
    %c0_i32 = arith.constant 0 : i32
    %c0_i32_0 = arith.constant 0 : i32
    %c0_i32_1 = arith.constant 0 : i32
    return %c0_i32, %c0_i32_0 : i32, i32
  }
  func.func @transform_7(%arg0: i32, %arg1: i32) -> (i32, i32) {
    %c0_i32 = arith.constant 0 : i32
    %c0_i32_0 = arith.constant 0 : i32
    %c0_i32_1 = arith.constant 0 : i32
    return %c0_i32, %c0_i32_0 : i32, i32
  }
  func.func @transform_8(%arg0: i32, %arg1: i32) -> (i32, i32) {
    %c0_i32 = arith.constant 0 : i32
    %c0_i32_0 = arith.constant 0 : i32
    %c0_i32_1 = arith.constant 0 : i32
    return %c0_i32, %c0_i32_0 : i32, i32
  }
  func.func @transform_9(%arg0: i32, %arg1: i32) -> (i32, i32) {
    %c0_i32 = arith.constant 0 : i32
    %c0_i32_0 = arith.constant 0 : i32
    return %arg0, %c0_i32 : i32, i32
  }
}

</mosaic_0001>

<llo_original>
// kernel: fcnn_forward.1
$region0: #{fcnn_forward.1}
  #allocation0 [shape = 'u32[]', space=smem, size = 0x4, offset = 0x4, fixed_abs, tag = 'smem constant byte address 0x4 - core index']
  #allocation1 [shape = 'u32[144,128]{1,0:T(1,128)}', space=vmem, size = 0x12000, scoped, tag = 'internal scratch']
  #allocation2 [shape = 'f32[16,512]{1,0:T(8,128)}', space=vmem, size = 0x8000, scoped, tag = 'scratch operand']
  %s0 = inlined_call_operand.hbm [shape: bf16[16,1024], index: 0, kind: input, shape index: {}]
  %s1 = inlined_call_operand.hbm [shape: bf16[1024,512], index: 1, kind: input, shape index: {}]
  %s2 = inlined_call_operand.hbm [shape: f32[1,512], index: 2, kind: input, shape index: {}]
  %s3 = inlined_call_operand.hbm [shape: bf16[512,256], index: 3, kind: input, shape index: {}]
  %s4 = inlined_call_operand.hbm [shape: f32[1,256], index: 4, kind: input, shape index: {}]
  %s5 = inlined_call_operand.hbm [shape: bf16[256,4], index: 5, kind: input, shape index: {}]
  %s6 = inlined_call_operand.hbm [shape: f32[1,4], index: 6, kind: input, shape index: {}]
  %s7 = inlined_call_operand.hbm [shape: bf16[4,32], index: 7, kind: input, shape index: {}]
  %s8 = inlined_call_operand.hbm [shape: f32[1,32], index: 8, kind: input, shape index: {}]
  %s9 = inlined_call_operand.hbm [shape: f32[16,32], index: 9, kind: output, shape index: {}]
  %s10 = sld [smem:[#allocation0]]
  $region90: #{fcnn_forward.1} parent=0
    _
  %s12 = ssub.s32 1, %s10
  %s13 = scalar_select 0, %s12, %s10
  $region1: #{fcnn_forward.1} parent=0
    #allocation3 [shape = 'u8[32768]{0}', space=vmem, size = 0x8000, scoped, tag = 'input window, operand 0, single buffered']
    #allocation4 [shape = 's32[1]{0}', space=sflag, size = 0x4, scoped, tag = 'scoped memory for fcnn_forward.1']
    #allocation5 [shape = 's32[1]{0}', space=sflag, size = 0x4, scoped, tag = 'scoped memory for fcnn_forward.1']
    #allocation6 [shape = 'u8[1048576]{0}', space=vmem, size = 0x100000, scoped, tag = 'input window, operand 1, single buffered']
    #allocation7 [shape = 's32[1]{0}', space=sflag, size = 0x4, scoped, tag = 'scoped memory for fcnn_forward.1']
    #allocation8 [shape = 'u8[2048]{0}', space=vmem, size = 0x800, scoped, tag = 'input window, operand 2, single buffered']
    #allocation9 [shape = 'u8[262144]{0}', space=vmem, size = 0x40000, scoped, tag = 'input window, operand 3, single buffered']
    #allocation10 [shape = 's32[1]{0}', space=sflag, size = 0x4, scoped, tag = 'scoped memory for fcnn_forward.1']
    #allocation11 [shape = 'u8[1024]{0}', space=vmem, size = 0x400, scoped, tag = 'input window, operand 4, single buffered']
    #allocation12 [shape = 'u8[65536]{0}', space=vmem, size = 0x10000, scoped, tag = 'input window, operand 5, single buffered']
    #allocation13 [shape = 's32[1]{0}', space=sflag, size = 0x4, scoped, tag = 'scoped memory for fcnn_forward.1']
    #allocation14 [shape = 'u8[512]{0}', space=vmem, size = 0x400, scoped, tag = 'input window, operand 6, single buffered']
    #allocation15 [shape = 'u8[1024]{0}', space=vmem, size = 0x400, scoped, tag = 'input window, operand 7, single buffered']
    #allocation16 [shape = 's32[1]{0}', space=sflag, size = 0x4, scoped, tag = 'scoped memory for fcnn_forward.1']
    #allocation17 [shape = 'u8[512]{0}', space=vmem, size = 0x400, scoped, tag = 'input window, operand 8, single buffered']
    #allocation18 [shape = 'u8[8192]{0}', space=vmem, size = 0x2000, scoped, tag = 'output window, operand 0, single buffered']
    %14 = vsyncpa [#allocation4], 0
    %15 = vsyncpa [#allocation7], 0
    %16 = vsyncpa [#allocation10], 0
    %17 = vsyncpa [#allocation13], 0
    %18 = vsyncpa [#allocation16], 0
    %19 = vsyncpa [#allocation5], 0
    // Predicated region
    $region2: #{fcnn_forward.1} parent=1 // pred_check
      _
    $region3: #{fcnn_forward.1} parent=1 // pred_check_branch
      %21 = sbr.rel (0) target = $region5
    $region4: #{fcnn_forward.1} parent=1 // pred_region
      %s23 = ssub.s32 1024, 1024
      %24 = vsyncadd [#allocation4], %s23
      %s25 = sshll.u32 [#allocation3], 4
      %s26 = int_to_ptr.vmem [resolvable:$true] %s25
      %31 = dma.hbm_to_vmem [thread:$0]  %s0, 1024, %s26, [#allocation4], 512, 512, 32
    $region5: #{fcnn_forward.1} parent=1 // pred_fallthru
      _
    // Predicated region
    $region6: #{fcnn_forward.1} parent=1 // pred_check
      _
    $region7: #{fcnn_forward.1} parent=1 // pred_check_branch
      %33 = sbr.rel (0) target = $region9
    $region8: #{fcnn_forward.1} parent=1 // pred_region
      %s35 = ssub.s32 32768, 32768
      %36 = vsyncadd [#allocation7], %s35
      %s37 = sshll.u32 [#allocation6], 4
      %s38 = int_to_ptr.vmem [resolvable:$true] %s37
      %43 = dma.hbm_to_vmem [thread:$0]  %s1, 32768, %s38, [#allocation7], 256, 256, 16
    $region9: #{fcnn_forward.1} parent=1 // pred_fallthru
      _
    // Predicated region
    $region10: #{fcnn_forward.1} parent=1 // pred_check
      _
    $region11: #{fcnn_forward.1} parent=1 // pred_check_branch
      %45 = sbr.rel (0) target = $region13
    $region12: #{fcnn_forward.1} parent=1 // pred_region
      %s47 = ssub.s32 64, 64
      %48 = vsyncadd [#allocation7], %s47
      %s50 = sshll.u32 [#allocation8], 4
      %s51 = int_to_ptr.vmem [resolvable:$true] %s50
      %53 = dma.hbm_to_vmem [thread:$0]  %s2, 64, %s51, [#allocation7]
    $region13: #{fcnn_forward.1} parent=1 // pred_fallthru
      _
    // Predicated region
    $region14: #{fcnn_forward.1} parent=1 // pred_check
      _
    $region15: #{fcnn_forward.1} parent=1 // pred_check_branch
      %55 = sbr.rel (0) target = $region17
    $region16: #{fcnn_forward.1} parent=1 // pred_region
      %s57 = ssub.s32 8192, 8192
      %58 = vsyncadd [#allocation10], %s57
      %s59 = sshll.u32 [#allocation9], 4
      %s60 = int_to_ptr.vmem [resolvable:$true] %s59
      %65 = dma.hbm_to_vmem [thread:$0]  %s3, 8192, %s60, [#allocation10], 128, 128, 8
    $region17: #{fcnn_forward.1} parent=1 // pred_fallthru
      _
    // Predicated region
    $region18: #{fcnn_forward.1} parent=1 // pred_check
      _
    $region19: #{fcnn_forward.1} parent=1 // pred_check_branch
      %67 = sbr.rel (0) target = $region21
    $region20: #{fcnn_forward.1} parent=1 // pred_region
      %s69 = ssub.s32 32, 32
      %70 = vsyncadd [#allocation10], %s69
      %s72 = sshll.u32 [#allocation11], 4
      %s73 = int_to_ptr.vmem [resolvable:$true] %s72
      %75 = dma.hbm_to_vmem [thread:$0]  %s4, 32, %s73, [#allocation10]
    $region21: #{fcnn_forward.1} parent=1 // pred_fallthru
      _
    // Predicated region
    $region22: #{fcnn_forward.1} parent=1 // pred_check
      _
    $region23: #{fcnn_forward.1} parent=1 // pred_check_branch
      %77 = sbr.rel (0) target = $region25
    $region24: #{fcnn_forward.1} parent=1 // pred_region
      %s79 = ssub.s32 2048, 2048
      %80 = vsyncadd [#allocation13], %s79
      %s81 = sshll.u32 [#allocation12], 4
      %s82 = int_to_ptr.vmem [resolvable:$true] %s81
      %87 = dma.hbm_to_vmem [thread:$0]  %s5, 2048, %s82, [#allocation13], 64, 64, 4
    $region25: #{fcnn_forward.1} parent=1 // pred_fallthru
      _
    // Predicated region
    $region26: #{fcnn_forward.1} parent=1 // pred_check
      _
    $region27: #{fcnn_forward.1} parent=1 // pred_check_branch
      %89 = sbr.rel (0) target = $region29
    $region28: #{fcnn_forward.1} parent=1 // pred_region
      %s91 = ssub.s32 16, 16
      %92 = vsyncadd [#allocation13], %s91
      %s94 = sshll.u32 [#allocation14], 4
      %s95 = int_to_ptr.vmem [resolvable:$true] %s94
      %97 = dma.hbm_to_vmem [thread:$0]  %s6, 16, %s95, [#allocation13]
    $region29: #{fcnn_forward.1} parent=1 // pred_fallthru
      _
    // Predicated region
    $region30: #{fcnn_forward.1} parent=1 // pred_check
      _
    $region31: #{fcnn_forward.1} parent=1 // pred_check_branch
      %99 = sbr.rel (0) target = $region33
    $region32: #{fcnn_forward.1} parent=1 // pred_region
      %s101 = ssub.s32 32, 32
      %102 = vsyncadd [#allocation16], %s101
      %s104 = sshll.u32 [#allocation15], 4
      %s105 = int_to_ptr.vmem [resolvable:$true] %s104
      %107 = dma.hbm_to_vmem [thread:$0]  %s7, 32, %s105, [#allocation16]
    $region33: #{fcnn_forward.1} parent=1 // pred_fallthru
      _
    // Predicated region
    $region34: #{fcnn_forward.1} parent=1 // pred_check
      _
    $region35: #{fcnn_forward.1} parent=1 // pred_check_branch
      %109 = sbr.rel (0) target = $region37
    $region36: #{fcnn_forward.1} parent=1 // pred_region
      %s111 = ssub.s32 16, 16
      %112 = vsyncadd [#allocation16], %s111
      %s114 = sshll.u32 [#allocation17], 4
      %s115 = int_to_ptr.vmem [resolvable:$true] %s114
      %117 = dma.hbm_to_vmem [thread:$0]  %s8, 16, %s115, [#allocation16]
    $region37: #{fcnn_forward.1} parent=1 // pred_fallthru
      _
    // Predicated region
    $region38: #{fcnn_forward.1} parent=1 // pred_check
      _
    $region39: #{fcnn_forward.1} parent=1 // pred_check_branch
      %119 = sbr.rel (0) target = $region41
    $region40: #{fcnn_forward.1} parent=1 // pred_region
      %120 = dma.done [#allocation4], 1024
    $region41: #{fcnn_forward.1} parent=1 // pred_fallthru
      _
    // Predicated region
    $region42: #{fcnn_forward.1} parent=1 // pred_check
      _
    $region43: #{fcnn_forward.1} parent=1 // pred_check_branch
      %122 = sbr.rel (0) target = $region45
    $region44: #{fcnn_forward.1} parent=1 // pred_region
      %123 = dma.done [#allocation7], 32768
    $region45: #{fcnn_forward.1} parent=1 // pred_fallthru
      _
    // Predicated region
    $region46: #{fcnn_forward.1} parent=1 // pred_check
      _
    $region47: #{fcnn_forward.1} parent=1 // pred_check_branch
      %125 = sbr.rel (0) target = $region49
    $region48: #{fcnn_forward.1} parent=1 // pred_region
      %126 = dma.done [#allocation7], 64
    $region49: #{fcnn_forward.1} parent=1 // pred_fallthru
      _
    // Predicated region
    $region50: #{fcnn_forward.1} parent=1 // pred_check
      _
    $region51: #{fcnn_forward.1} parent=1 // pred_check_branch
      %128 = sbr.rel (0) target = $region53
    $region52: #{fcnn_forward.1} parent=1 // pred_region
      %129 = dma.done [#allocation10], 8192
    $region53: #{fcnn_forward.1} parent=1 // pred_fallthru
      _
    // Predicated region
    $region54: #{fcnn_forward.1} parent=1 // pred_check
      _
    $region55: #{fcnn_forward.1} parent=1 // pred_check_branch
      %131 = sbr.rel (0) target = $region57
    $region56: #{fcnn_forward.1} parent=1 // pred_region
      %132 = dma.done [#allocation10], 32
    $region57: #{fcnn_forward.1} parent=1 // pred_fallthru
      _
    // Predicated region
    $region58: #{fcnn_forward.1} parent=1 // pred_check
      _
    $region59: #{fcnn_forward.1} parent=1 // pred_check_branch
      %134 = sbr.rel (0) target = $region61
    $region60: #{fcnn_forward.1} parent=1 // pred_region
      %135 = dma.done [#allocation13], 2048
    $region61: #{fcnn_forward.1} parent=1 // pred_fallthru
      _
    // Predicated region
    $region62: #{fcnn_forward.1} parent=1 // pred_check
      _
    $region63: #{fcnn_forward.1} parent=1 // pred_check_branch
      %137 = sbr.rel (0) target = $region65
    $region64: #{fcnn_forward.1} parent=1 // pred_region
      %138 = dma.done [#allocation13], 16
    $region65: #{fcnn_forward.1} parent=1 // pred_fallthru
      _
    // Predicated region
    $region66: #{fcnn_forward.1} parent=1 // pred_check
      _
    $region67: #{fcnn_forward.1} parent=1 // pred_check_branch
      %140 = sbr.rel (0) target = $region69
    $region68: #{fcnn_forward.1} parent=1 // pred_region
      %141 = dma.done [#allocation16], 32
    $region69: #{fcnn_forward.1} parent=1 // pred_fallthru
      _
    // Predicated region
    $region70: #{fcnn_forward.1} parent=1 // pred_check
      _
    $region71: #{fcnn_forward.1} parent=1 // pred_check_branch
      %143 = sbr.rel (0) target = $region73
    $region72: #{fcnn_forward.1} parent=1 // pred_region
      %144 = dma.done [#allocation16], 16
    $region73: #{fcnn_forward.1} parent=1 // pred_fallthru
      _
    %p146 = scmp.eq.s32.totalorder 0, 0
    // Predicated region
    $region74: #{fcnn_forward.1} parent=1 // pred_check
      %p147 = pneg %p146
    $region75: #{fcnn_forward.1} parent=1 // pred_check_branch
      %149 = sbr.rel (%p147) target = $region77
    $region76: #{fcnn_forward.1} parent=1 // pred_region
      %150 = vst [vmem:[#allocation2] sm:$0xff] 0.0
      %151 = vst [vmem:[#allocation2 + $0x8] sm:$0xff] 0.0
      %152 = vst [vmem:[#allocation2 + $0x10] sm:$0xff] 0.0
      %153 = vst [vmem:[#allocation2 + $0x18] sm:$0xff] 0.0
      %154 = vst [vmem:[#allocation2 + $0x20] sm:$0xff] 0.0
      %155 = vst [vmem:[#allocation2 + $0x28] sm:$0xff] 0.0
      %156 = vst [vmem:[#allocation2 + $0x30] sm:$0xff] 0.0
      %157 = vst [vmem:[#allocation2 + $0x38] sm:$0xff] 0.0
    $region77: #{fcnn_forward.1} parent=1 // pred_fallthru
      _
    %v158 = vld [vmem:[#allocation2] sm:$0xff]
    %v159 = vld [vmem:[#allocation2 + $0x8] sm:$0xff]
    %v160 = vld [vmem:[#allocation2 + $0x10] sm:$0xff]
    %v161 = vld [vmem:[#allocation2 + $0x18] sm:$0xff]
    %v162 = vld [vmem:[#allocation2 + $0x20] sm:$0xff]
    %v163 = vld [vmem:[#allocation2 + $0x28] sm:$0xff]
    %v164 = vld [vmem:[#allocation2 + $0x30] sm:$0xff]
    %v165 = vld [vmem:[#allocation2 + $0x38] sm:$0xff]
    %v166 = vld [vmem:[#allocation3] sm:$0xff]
    %v167 = vld [vmem:[#allocation3 + $0x8] sm:$0xff]
    %v168 = vld [vmem:[#allocation3 + $0x10] sm:$0xff]
    %v169 = vld [vmem:[#allocation3 + $0x18] sm:$0xff]
    %v170 = vld [vmem:[#allocation3 + $0x20] sm:$0xff]
    %v171 = vld [vmem:[#allocation3 + $0x28] sm:$0xff]
    %v172 = vld [vmem:[#allocation3 + $0x30] sm:$0xff]
    %v173 = vld [vmem:[#allocation3 + $0x38] sm:$0xff]
    %v174 = vld [vmem:[#allocation6] sm:$0xff]
    %v175 = vld [vmem:[#allocation6 + $0x8] sm:$0xff]
    %v176 = vld [vmem:[#allocation6 + $0x10] sm:$0xff]
    %v177 = vld [vmem:[#allocation6 + $0x18] sm:$0xff]
    %v178 = vld [vmem:[#allocation6 + $0x20] sm:$0xff]
    %v179 = vld [vmem:[#allocation6 + $0x28] sm:$0xff]
    %v180 = vld [vmem:[#allocation6 + $0x30] sm:$0xff]
    %v181 = vld [vmem:[#allocation6 + $0x38] sm:$0xff]
    %v182 = vld [vmem:[#allocation6 + $0x40] sm:$0xff]
    %v183 = vld [vmem:[#allocation6 + $0x48] sm:$0xff]
    %v184 = vld [vmem:[#allocation6 + $0x50] sm:$0xff]
    %v185 = vld [vmem:[#allocation6 + $0x58] sm:$0xff]
    %v186 = vld [vmem:[#allocation6 + $0x60] sm:$0xff]
    %v187 = vld [vmem:[#allocation6 + $0x68] sm:$0xff]
    %v188 = vld [vmem:[#allocation6 + $0x70] sm:$0xff]
    %v189 = vld [vmem:[#allocation6 + $0x78] sm:$0xff]
    %v190 = vld [vmem:[#allocation6 + $0x80] sm:$0xff]
    %v191 = vld [vmem:[#allocation6 + $0x88] sm:$0xff]
    %v192 = vld [vmem:[#allocation6 + $0x90] sm:$0xff]
    %v193 = vld [vmem:[#allocation6 + $0x98] sm:$0xff]
    %v194 = vld [vmem:[#allocation6 + $0xa0] sm:$0xff]
    %v195 = vld [vmem:[#allocation6 + $0xa8] sm:$0xff]
    %v196 = vld [vmem:[#allocation6 + $0xb0] sm:$0xff]
    %v197 = vld [vmem:[#allocation6 + $0xb8] sm:$0xff]
    %v198 = vld [vmem:[#allocation6 + $0xc0] sm:$0xff]
    %v199 = vld [vmem:[#allocation6 + $0xc8] sm:$0xff]
    %v200 = vld [vmem:[#allocation6 + $0xd0] sm:$0xff]
    %v201 = vld [vmem:[#allocation6 + $0xd8] sm:$0xff]
    %v202 = vld [vmem:[#allocation6 + $0xe0] sm:$0xff]
    %v203 = vld [vmem:[#allocation6 + $0xe8] sm:$0xff]
    %v204 = vld [vmem:[#allocation6 + $0xf0] sm:$0xff]
    %v205 = vld [vmem:[#allocation6 + $0xf8] sm:$0xff]
    %v206 = vld [vmem:[#allocation6 + $0x100] sm:$0xff]
    %v207 = vld [vmem:[#allocation6 + $0x108] sm:$0xff]
    %v208 = vld [vmem:[#allocation6 + $0x110] sm:$0xff]
    %v209 = vld [vmem:[#allocation6 + $0x118] sm:$0xff]
    %v210 = vld [vmem:[#allocation6 + $0x120] sm:$0xff]
    %v211 = vld [vmem:[#allocation6 + $0x128] sm:$0xff]
    %v212 = vld [vmem:[#allocation6 + $0x130] sm:$0xff]
    %v213 = vld [vmem:[#allocation6 + $0x138] sm:$0xff]
    %v214 = vld [vmem:[#allocation6 + $0x140] sm:$0xff]
    %v215 = vld [vmem:[#allocation6 + $0x148] sm:$0xff]
    %v216 = vld [vmem:[#allocation6 + $0x150] sm:$0xff]
    %v217 = vld [vmem:[#allocation6 + $0x158] sm:$0xff]
    %v218 = vld [vmem:[#allocation6 + $0x160] sm:$0xff]
    %v219 = vld [vmem:[#allocation6 + $0x168] sm:$0xff]
    %v220 = vld [vmem:[#allocation6 + $0x170] sm:$0xff]
    %v221 = vld [vmem:[#allocation6 + $0x178] sm:$0xff]
    %v222 = vld [vmem:[#allocation6 + $0x180] sm:$0xff]
    %v223 = vld [vmem:[#allocation6 + $0x188] sm:$0xff]
    %v224 = vld [vmem:[#allocation6 + $0x190] sm:$0xff]
    %v225 = vld [vmem:[#allocation6 + $0x198] sm:$0xff]
    %v226 = vld [vmem:[#allocation6 + $0x1a0] sm:$0xff]
    %v227 = vld [vmem:[#allocation6 + $0x1a8] sm:$0xff]
    %v228 = vld [vmem:[#allocation6 + $0x1b0] sm:$0xff]
    %v229 = vld [vmem:[#allocation6 + $0x1b8] sm:$0xff]
    %v230 = vld [vmem:[#allocation6 + $0x1c0] sm:$0xff]
    %v231 = vld [vmem:[#allocation6 + $0x1c8] sm:$0xff]
    %v232 = vld [vmem:[#allocation6 + $0x1d0] sm:$0xff]
    %v233 = vld [vmem:[#allocation6 + $0x1d8] sm:$0xff]
    %v234 = vld [vmem:[#allocation6 + $0x1e0] sm:$0xff]
    %v235 = vld [vmem:[#allocation6 + $0x1e8] sm:$0xff]
    %v236 = vld [vmem:[#allocation6 + $0x1f0] sm:$0xff]
    %v237 = vld [vmem:[#allocation6 + $0x1f8] sm:$0xff]
    %v238 = vld [vmem:[#allocation6 + $0x200] sm:$0xff]
    %v239 = vld [vmem:[#allocation6 + $0x208] sm:$0xff]
    %v240 = vld [vmem:[#allocation6 + $0x210] sm:$0xff]
    %v241 = vld [vmem:[#allocation6 + $0x218] sm:$0xff]
    %v242 = vld [vmem:[#allocation6 + $0x220] sm:$0xff]
    %v243 = vld [vmem:[#allocation6 + $0x228] sm:$0xff]
    %v244 = vld [vmem:[#allocation6 + $0x230] sm:$0xff]
    %v245 = vld [vmem:[#allocation6 + $0x238] sm:$0xff]
    %v246 = vld [vmem:[#allocation6 + $0x240] sm:$0xff]
    %v247 = vld [vmem:[#allocation6 + $0x248] sm:$0xff]
    %v248 = vld [vmem:[#allocation6 + $0x250] sm:$0xff]
    %v249 = vld [vmem:[#allocation6 + $0x258] sm:$0xff]
    %v250 = vld [vmem:[#allocation6 + $0x260] sm:$0xff]
    %v251 = vld [vmem:[#allocation6 + $0x268] sm:$0xff]
    %v252 = vld [vmem:[#allocation6 + $0x270] sm:$0xff]
    %v253 = vld [vmem:[#allocation6 + $0x278] sm:$0xff]
    %v254 = vld [vmem:[#allocation6 + $0x280] sm:$0xff]
    %v255 = vld [vmem:[#allocation6 + $0x288] sm:$0xff]
    %v256 = vld [vmem:[#allocation6 + $0x290] sm:$0xff]
    %v257 = vld [vmem:[#allocation6 + $0x298] sm:$0xff]
    %v258 = vld [vmem:[#allocation6 + $0x2a0] sm:$0xff]
    %v259 = vld [vmem:[#allocation6 + $0x2a8] sm:$0xff]
    %v260 = vld [vmem:[#allocation6 + $0x2b0] sm:$0xff]
    %v261 = vld [vmem:[#allocation6 + $0x2b8] sm:$0xff]
    %v262 = vld [vmem:[#allocation6 + $0x2c0] sm:$0xff]
    %v263 = vld [vmem:[#allocation6 + $0x2c8] sm:$0xff]
    %v264 = vld [vmem:[#allocation6 + $0x2d0] sm:$0xff]
    %v265 = vld [vmem:[#allocation6 + $0x2d8] sm:$0xff]
    %v266 = vld [vmem:[#allocation6 + $0x2e0] sm:$0xff]
    %v267 = vld [vmem:[#allocation6 + $0x2e8] sm:$0xff]
    %v268 = vld [vmem:[#allocation6 + $0x2f0] sm:$0xff]
    %v269 = vld [vmem:[#allocation6 + $0x2f8] sm:$0xff]
    %v270 = vld [vmem:[#allocation6 + $0x300] sm:$0xff]
    %v271 = vld [vmem:[#allocation6 + $0x308] sm:$0xff]
    %v272 = vld [vmem:[#allocation6 + $0x310] sm:$0xff]
    %v273 = vld [vmem:[#allocation6 + $0x318] sm:$0xff]
    %v274 = vld [vmem:[#allocation6 + $0x320] sm:$0xff]
    %v275 = vld [vmem:[#allocation6 + $0x328] sm:$0xff]
    %v276 = vld [vmem:[#allocation6 + $0x330] sm:$0xff]
    %v277 = vld [vmem:[#allocation6 + $0x338] sm:$0xff]
    %v278 = vld [vmem:[#allocation6 + $0x340] sm:$0xff]
    %v279 = vld [vmem:[#allocation6 + $0x348] sm:$0xff]
    %v280 = vld [vmem:[#allocation6 + $0x350] sm:$0xff]
    %v281 = vld [vmem:[#allocation6 + $0x358] sm:$0xff]
    %v282 = vld [vmem:[#allocation6 + $0x360] sm:$0xff]
    %v283 = vld [vmem:[#allocation6 + $0x368] sm:$0xff]
    %v284 = vld [vmem:[#allocation6 + $0x370] sm:$0xff]
    %v285 = vld [vmem:[#allocation6 + $0x378] sm:$0xff]
    %v286 = vld [vmem:[#allocation6 + $0x380] sm:$0xff]
    %v287 = vld [vmem:[#allocation6 + $0x388] sm:$0xff]
    %v288 = vld [vmem:[#allocation6 + $0x390] sm:$0xff]
    %v289 = vld [vmem:[#allocation6 + $0x398] sm:$0xff]
    %v290 = vld [vmem:[#allocation6 + $0x3a0] sm:$0xff]
    %v291 = vld [vmem:[#allocation6 + $0x3a8] sm:$0xff]
    %v292 = vld [vmem:[#allocation6 + $0x3b0] sm:$0xff]
    %v293 = vld [vmem:[#allocation6 + $0x3b8] sm:$0xff]
    %v294 = vld [vmem:[#allocation6 + $0x3c0] sm:$0xff]
    %v295 = vld [vmem:[#allocation6 + $0x3c8] sm:$0xff]
    %v296 = vld [vmem:[#allocation6 + $0x3d0] sm:$0xff]
    %v297 = vld [vmem:[#allocation6 + $0x3d8] sm:$0xff]
    %v298 = vld [vmem:[#allocation6 + $0x3e0] sm:$0xff]
    %v299 = vld [vmem:[#allocation6 + $0x3e8] sm:$0xff]
    %v300 = vld [vmem:[#allocation6 + $0x3f0] sm:$0xff]
    %v301 = vld [vmem:[#allocation6 + $0x3f8] sm:$0xff]
    %v302 = vld [vmem:[#allocation6 + $0x400] sm:$0xff]
    %v303 = vld [vmem:[#allocation6 + $0x408] sm:$0xff]
    %v304 = vld [vmem:[#allocation6 + $0x410] sm:$0xff]
    %v305 = vld [vmem:[#allocation6 + $0x418] sm:$0xff]
    %v306 = vld [vmem:[#allocation6 + $0x420] sm:$0xff]
    %v307 = vld [vmem:[#allocation6 + $0x428] sm:$0xff]
    %v308 = vld [vmem:[#allocation6 + $0x430] sm:$0xff]
    %v309 = vld [vmem:[#allocation6 + $0x438] sm:$0xff]
    %v310 = vld [vmem:[#allocation6 + $0x440] sm:$0xff]
    %v311 = vld [vmem:[#allocation6 + $0x448] sm:$0xff]
    %v312 = vld [vmem:[#allocation6 + $0x450] sm:$0xff]
    %v313 = vld [vmem:[#allocation6 + $0x458] sm:$0xff]
    %v314 = vld [vmem:[#allocation6 + $0x460] sm:$0xff]
    %v315 = vld [vmem:[#allocation6 + $0x468] sm:$0xff]
    %v316 = vld [vmem:[#allocation6 + $0x470] sm:$0xff]
    %v317 = vld [vmem:[#allocation6 + $0x478] sm:$0xff]
    %v318 = vld [vmem:[#allocation6 + $0x480] sm:$0xff]
    %v319 = vld [vmem:[#allocation6 + $0x488] sm:$0xff]
    %v320 = vld [vmem:[#allocation6 + $0x490] sm:$0xff]
    %v321 = vld [vmem:[#allocation6 + $0x498] sm:$0xff]
    %v322 = vld [vmem:[#allocation6 + $0x4a0] sm:$0xff]
    %v323 = vld [vmem:[#allocation6 + $0x4a8] sm:$0xff]
    %v324 = vld [vmem:[#allocation6 + $0x4b0] sm:$0xff]
    %v325 = vld [vmem:[#allocation6 + $0x4b8] sm:$0xff]
    %v326 = vld [vmem:[#allocation6 + $0x4c0] sm:$0xff]
    %v327 = vld [vmem:[#allocation6 + $0x4c8] sm:$0xff]
    %v328 = vld [vmem:[#allocation6 + $0x4d0] sm:$0xff]
    %v329 = vld [vmem:[#allocation6 + $0x4d8] sm:$0xff]
    %v330 = vld [vmem:[#allocation6 + $0x4e0] sm:$0xff]
    %v331 = vld [vmem:[#allocation6 + $0x4e8] sm:$0xff]
    %v332 = vld [vmem:[#allocation6 + $0x4f0] sm:$0xff]
    %v333 = vld [vmem:[#allocation6 + $0x4f8] sm:$0xff]
    %v334 = vld [vmem:[#allocation6 + $0x500] sm:$0xff]
    %v335 = vld [vmem:[#allocation6 + $0x508] sm:$0xff]
    %v336 = vld [vmem:[#allocation6 + $0x510] sm:$0xff]
    %v337 = vld [vmem:[#allocation6 + $0x518] sm:$0xff]
    %v338 = vld [vmem:[#allocation6 + $0x520] sm:$0xff]
    %v339 = vld [vmem:[#allocation6 + $0x528] sm:$0xff]
    %v340 = vld [vmem:[#allocation6 + $0x530] sm:$0xff]
    %v341 = vld [vmem:[#allocation6 + $0x538] sm:$0xff]
    %v342 = vld [vmem:[#allocation6 + $0x540] sm:$0xff]
    %v343 = vld [vmem:[#allocation6 + $0x548] sm:$0xff]
    %v344 = vld [vmem:[#allocation6 + $0x550] sm:$0xff]
    %v345 = vld [vmem:[#allocation6 + $0x558] sm:$0xff]
    %v346 = vld [vmem:[#allocation6 + $0x560] sm:$0xff]
    %v347 = vld [vmem:[#allocation6 + $0x568] sm:$0xff]
    %v348 = vld [vmem:[#allocation6 + $0x570] sm:$0xff]
    %v349 = vld [vmem:[#allocation6 + $0x578] sm:$0xff]
    %v350 = vld [vmem:[#allocation6 + $0x580] sm:$0xff]
    %v351 = vld [vmem:[#allocation6 + $0x588] sm:$0xff]
    %v352 = vld [vmem:[#allocation6 + $0x590] sm:$0xff]
    %v353 = vld [vmem:[#allocation6 + $0x598] sm:$0xff]
    %v354 = vld [vmem:[#allocation6 + $0x5a0] sm:$0xff]
    %v355 = vld [vmem:[#allocation6 + $0x5a8] sm:$0xff]
    %v356 = vld [vmem:[#allocation6 + $0x5b0] sm:$0xff]
    %v357 = vld [vmem:[#allocation6 + $0x5b8] sm:$0xff]
    %v358 = vld [vmem:[#allocation6 + $0x5c0] sm:$0xff]
    %v359 = vld [vmem:[#allocation6 + $0x5c8] sm:$0xff]
    %v360 = vld [vmem:[#allocation6 + $0x5d0] sm:$0xff]
    %v361 = vld [vmem:[#allocation6 + $0x5d8] sm:$0xff]
    %v362 = vld [vmem:[#allocation6 + $0x5e0] sm:$0xff]
    %v363 = vld [vmem:[#allocation6 + $0x5e8] sm:$0xff]
    %v364 = vld [vmem:[#allocation6 + $0x5f0] sm:$0xff]
    %v365 = vld [vmem:[#allocation6 + $0x5f8] sm:$0xff]
    %v366 = vld [vmem:[#allocation6 + $0x600] sm:$0xff]
    %v367 = vld [vmem:[#allocation6 + $0x608] sm:$0xff]
    %v368 = vld [vmem:[#allocation6 + $0x610] sm:$0xff]
    %v369 = vld [vmem:[#allocation6 + $0x618] sm:$0xff]
    %v370 = vld [vmem:[#allocation6 + $0x620] sm:$0xff]
    %v371 = vld [vmem:[#allocation6 + $0x628] sm:$0xff]
    %v372 = vld [vmem:[#allocation6 + $0x630] sm:$0xff]
    %v373 = vld [vmem:[#allocation6 + $0x638] sm:$0xff]
    %v374 = vld [vmem:[#allocation6 + $0x640] sm:$0xff]
    %v375 = vld [vmem:[#allocation6 + $0x648] sm:$0xff]
    %v376 = vld [vmem:[#allocation6 + $0x650] sm:$0xff]
    %v377 = vld [vmem:[#allocation6 + $0x658] sm:$0xff]
    %v378 = vld [vmem:[#allocation6 + $0x660] sm:$0xff]
    %v379 = vld [vmem:[#allocation6 + $0x668] sm:$0xff]
    %v380 = vld [vmem:[#allocation6 + $0x670] sm:$0xff]
    %v381 = vld [vmem:[#allocation6 + $0x678] sm:$0xff]
    %v382 = vld [vmem:[#allocation6 + $0x680] sm:$0xff]
    %v383 = vld [vmem:[#allocation6 + $0x688] sm:$0xff]
    %v384 = vld [vmem:[#allocation6 + $0x690] sm:$0xff]
    %v385 = vld [vmem:[#allocation6 + $0x698] sm:$0xff]
    %v386 = vld [vmem:[#allocation6 + $0x6a0] sm:$0xff]
    %v387 = vld [vmem:[#allocation6 + $0x6a8] sm:$0xff]
    %v388 = vld [vmem:[#allocation6 + $0x6b0] sm:$0xff]
    %v389 = vld [vmem:[#allocation6 + $0x6b8] sm:$0xff]
    %v390 = vld [vmem:[#allocation6 + $0x6c0] sm:$0xff]
    %v391 = vld [vmem:[#allocation6 + $0x6c8] sm:$0xff]
    %v392 = vld [vmem:[#allocation6 + $0x6d0] sm:$0xff]
    %v393 = vld [vmem:[#allocation6 + $0x6d8] sm:$0xff]
    %v394 = vld [vmem:[#allocation6 + $0x6e0] sm:$0xff]
    %v395 = vld [vmem:[#allocation6 + $0x6e8] sm:$0xff]
    %v396 = vld [vmem:[#allocation6 + $0x6f0] sm:$0xff]
    %v397 = vld [vmem:[#allocation6 + $0x6f8] sm:$0xff]
    %v398 = vld [vmem:[#allocation6 + $0x700] sm:$0xff]
    %v399 = vld [vmem:[#allocation6 + $0x708] sm:$0xff]
    %v400 = vld [vmem:[#allocation6 + $0x710] sm:$0xff]
    %v401 = vld [vmem:[#allocation6 + $0x718] sm:$0xff]
    %v402 = vld [vmem:[#allocation6 + $0x720] sm:$0xff]
    %v403 = vld [vmem:[#allocation6 + $0x728] sm:$0xff]
    %v404 = vld [vmem:[#allocation6 + $0x730] sm:$0xff]
    %v405 = vld [vmem:[#allocation6 + $0x738] sm:$0xff]
    %v406 = vld [vmem:[#allocation6 + $0x740] sm:$0xff]
    %v407 = vld [vmem:[#allocation6 + $0x748] sm:$0xff]
    %v408 = vld [vmem:[#allocation6 + $0x750] sm:$0xff]
    %v409 = vld [vmem:[#allocation6 + $0x758] sm:$0xff]
    %v410 = vld [vmem:[#allocation6 + $0x760] sm:$0xff]
    %v411 = vld [vmem:[#allocation6 + $0x768] sm:$0xff]
    %v412 = vld [vmem:[#allocation6 + $0x770] sm:$0xff]
    %v413 = vld [vmem:[#allocation6 + $0x778] sm:$0xff]
    %v414 = vld [vmem:[#allocation6 + $0x780] sm:$0xff]
    %v415 = vld [vmem:[#allocation6 + $0x788] sm:$0xff]
    %v416 = vld [vmem:[#allocation6 + $0x790] sm:$0xff]
    %v417 = vld [vmem:[#allocation6 + $0x798] sm:$0xff]
    %v418 = vld [vmem:[#allocation6 + $0x7a0] sm:$0xff]
    %v419 = vld [vmem:[#allocation6 + $0x7a8] sm:$0xff]
    %v420 = vld [vmem:[#allocation6 + $0x7b0] sm:$0xff]
    %v421 = vld [vmem:[#allocation6 + $0x7b8] sm:$0xff]
    %v422 = vld [vmem:[#allocation6 + $0x7c0] sm:$0xff]
    %v423 = vld [vmem:[#allocation6 + $0x7c8] sm:$0xff]
    %v424 = vld [vmem:[#allocation6 + $0x7d0] sm:$0xff]
    %v425 = vld [vmem:[#allocation6 + $0x7d8] sm:$0xff]
    %v426 = vld [vmem:[#allocation6 + $0x7e0] sm:$0xff]
    %v427 = vld [vmem:[#allocation6 + $0x7e8] sm:$0xff]
    %v428 = vld [vmem:[#allocation6 + $0x7f0] sm:$0xff]
    %v429 = vld [vmem:[#allocation6 + $0x7f8] sm:$0xff]
    %v438 = vunpack.c.l.b16 %v166
    %v439 = vunpack.c.h.b16 %v166
    %v440 = vunpack.c.l.b16 %v167
    %v441 = vunpack.c.h.b16 %v167
    %v442 = vunpack.c.l.b16 %v168
    %v443 = vunpack.c.h.b16 %v168
    %v444 = vunpack.c.l.b16 %v169
    %v445 = vunpack.c.h.b16 %v169
    %v446 = vunpack.c.l.b16 %v170
    %v447 = vunpack.c.h.b16 %v170
    %v448 = vunpack.c.l.b16 %v171
    %v449 = vunpack.c.h.b16 %v171
    %v450 = vunpack.c.l.b16 %v172
    %v451 = vunpack.c.h.b16 %v172
    %v452 = vunpack.c.l.b16 %v173
    %v453 = vunpack.c.h.b16 %v173
    %v454 = vpack.c.b16 %v446, %v438
    %v455 = vpack.c.b16 %v447, %v439
    %v456 = vpack.c.b16 %v448, %v440
    %v457 = vpack.c.b16 %v449, %v441
    %v458 = vpack.c.b16 %v450, %v442
    %v459 = vpack.c.b16 %v451, %v443
    %v460 = vpack.c.b16 %v452, %v444
    %v461 = vpack.c.b16 %v453, %v445
    %v726 = vunpack.c.l.b16 %v174
    %v727 = vunpack.c.h.b16 %v174
    %v728 = vunpack.c.l.b16 %v175
    %v729 = vunpack.c.h.b16 %v175
    %v730 = vunpack.c.l.b16 %v176
    %v731 = vunpack.c.h.b16 %v176
    %v732 = vunpack.c.l.b16 %v177
    %v733 = vunpack.c.h.b16 %v177
    %v734 = vunpack.c.l.b16 %v178
    %v735 = vunpack.c.h.b16 %v178
    %v736 = vunpack.c.l.b16 %v179
    %v737 = vunpack.c.h.b16 %v179
    %v738 = vunpack.c.l.b16 %v180
    %v739 = vunpack.c.h.b16 %v180
    %v740 = vunpack.c.l.b16 %v181
    %v741 = vunpack.c.h.b16 %v181
    %v742 = vunpack.c.l.b16 %v182
    %v743 = vunpack.c.h.b16 %v182
    %v744 = vunpack.c.l.b16 %v183
    %v745 = vunpack.c.h.b16 %v183
    %v746 = vunpack.c.l.b16 %v184
    %v747 = vunpack.c.h.b16 %v184
    %v748 = vunpack.c.l.b16 %v185
    %v749 = vunpack.c.h.b16 %v185
    %v750 = vunpack.c.l.b16 %v186
    %v751 = vunpack.c.h.b16 %v186
    %v752 = vunpack.c.l.b16 %v187
    %v753 = vunpack.c.h.b16 %v187
    %v754 = vunpack.c.l.b16 %v188
    %v755 = vunpack.c.h.b16 %v188
    %v756 = vunpack.c.l.b16 %v189
    %v757 = vunpack.c.h.b16 %v189
    %v758 = vunpack.c.l.b16 %v190
    %v759 = vunpack.c.h.b16 %v190
    %v760 = vunpack.c.l.b16 %v191
    %v761 = vunpack.c.h.b16 %v191
    %v762 = vunpack.c.l.b16 %v192
    %v763 = vunpack.c.h.b16 %v192
    %v764 = vunpack.c.l.b16 %v193
    %v765 = vunpack.c.h.b16 %v193
    %v766 = vunpack.c.l.b16 %v194
    %v767 = vunpack.c.h.b16 %v194
    %v768 = vunpack.c.l.b16 %v195
    %v769 = vunpack.c.h.b16 %v195
    %v770 = vunpack.c.l.b16 %v196
    %v771 = vunpack.c.h.b16 %v196
    %v772 = vunpack.c.l.b16 %v197
    %v773 = vunpack.c.h.b16 %v197
    %v774 = vunpack.c.l.b16 %v198
    %v775 = vunpack.c.h.b16 %v198
    %v776 = vunpack.c.l.b16 %v199
    %v777 = vunpack.c.h.b16 %v199
    %v778 = vunpack.c.l.b16 %v200
    %v779 = vunpack.c.h.b16 %v200
    %v780 = vunpack.c.l.b16 %v201
    %v781 = vunpack.c.h.b16 %v201
    %v782 = vunpack.c.l.b16 %v202
    %v783 = vunpack.c.h.b16 %v202
    %v784 = vunpack.c.l.b16 %v203
    %v785 = vunpack.c.h.b16 %v203
    %v786 = vunpack.c.l.b16 %v204
    %v787 = vunpack.c.h.b16 %v204
    %v788 = vunpack.c.l.b16 %v205
    %v789 = vunpack.c.h.b16 %v205
    %v790 = vunpack.c.l.b16 %v206
    %v791 = vunpack.c.h.b16 %v206
    %v792 = vunpack.c.l.b16 %v207
    %v793 = vunpack.c.h.b16 %v207
    %v794 = vunpack.c.l.b16 %v208
    %v795 = vunpack.c.h.b16 %v208
    %v796 = vunpack.c.l.b16 %v209
    %v797 = vunpack.c.h.b16 %v209
    %v798 = vunpack.c.l.b16 %v210
    %v799 = vunpack.c.h.b16 %v210
    %v800 = vunpack.c.l.b16 %v211
    %v801 = vunpack.c.h.b16 %v211
    %v802 = vunpack.c.l.b16 %v212
    %v803 = vunpack.c.h.b16 %v212
    %v804 = vunpack.c.l.b16 %v213
    %v805 = vunpack.c.h.b16 %v213
    %v806 = vunpack.c.l.b16 %v214
    %v807 = vunpack.c.h.b16 %v214
    %v808 = vunpack.c.l.b16 %v215
    %v809 = vunpack.c.h.b16 %v215
    %v810 = vunpack.c.l.b16 %v216
    %v811 = vunpack.c.h.b16 %v216
    %v812 = vunpack.c.l.b16 %v217
    %v813 = vunpack.c.h.b16 %v217
    %v814 = vunpack.c.l.b16 %v218
    %v815 = vunpack.c.h.b16 %v218
    %v816 = vunpack.c.l.b16 %v219
    %v817 = vunpack.c.h.b16 %v219
    %v818 = vunpack.c.l.b16 %v220
    %v819 = vunpack.c.h.b16 %v220
    %v820 = vunpack.c.l.b16 %v221
    %v821 = vunpack.c.h.b16 %v221
    %v822 = vunpack.c.l.b16 %v222
    %v823 = vunpack.c.h.b16 %v222
    %v824 = vunpack.c.l.b16 %v223
    %v825 = vunpack.c.h.b16 %v223
    %v826 = vunpack.c.l.b16 %v224
    %v827 = vunpack.c.h.b16 %v224
    %v828 = vunpack.c.l.b16 %v225
    %v829 = vunpack.c.h.b16 %v225
    %v830 = vunpack.c.l.b16 %v226
    %v831 = vunpack.c.h.b16 %v226
    %v832 = vunpack.c.l.b16 %v227
    %v833 = vunpack.c.h.b16 %v227
    %v834 = vunpack.c.l.b16 %v228
    %v835 = vunpack.c.h.b16 %v228
    %v836 = vunpack.c.l.b16 %v229
    %v837 = vunpack.c.h.b16 %v229
    %v838 = vunpack.c.l.b16 %v230
    %v839 = vunpack.c.h.b16 %v230
    %v840 = vunpack.c.l.b16 %v231
    %v841 = vunpack.c.h.b16 %v231
    %v842 = vunpack.c.l.b16 %v232
    %v843 = vunpack.c.h.b16 %v232
    %v844 = vunpack.c.l.b16 %v233
    %v845 = vunpack.c.h.b16 %v233
    %v846 = vunpack.c.l.b16 %v234
    %v847 = vunpack.c.h.b16 %v234
    %v848 = vunpack.c.l.b16 %v235
    %v849 = vunpack.c.h.b16 %v235
    %v850 = vunpack.c.l.b16 %v236
    %v851 = vunpack.c.h.b16 %v236
    %v852 = vunpack.c.l.b16 %v237
    %v853 = vunpack.c.h.b16 %v237
    %v854 = vunpack.c.l.b16 %v238
    %v855 = vunpack.c.h.b16 %v238
    %v856 = vunpack.c.l.b16 %v239
    %v857 = vunpack.c.h.b16 %v239
    %v858 = vunpack.c.l.b16 %v240
    %v859 = vunpack.c.h.b16 %v240
    %v860 = vunpack.c.l.b16 %v241
    %v861 = vunpack.c.h.b16 %v241
    %v862 = vunpack.c.l.b16 %v242
    %v863 = vunpack.c.h.b16 %v242
    %v864 = vunpack.c.l.b16 %v243
    %v865 = vunpack.c.h.b16 %v243
    %v866 = vunpack.c.l.b16 %v244
    %v867 = vunpack.c.h.b16 %v244
    %v868 = vunpack.c.l.b16 %v245
    %v869 = vunpack.c.h.b16 %v245
    %v870 = vunpack.c.l.b16 %v246
    %v871 = vunpack.c.h.b16 %v246
    %v872 = vunpack.c.l.b16 %v247
    %v873 = vunpack.c.h.b16 %v247
    %v874 = vunpack.c.l.b16 %v248
    %v875 = vunpack.c.h.b16 %v248
    %v876 = vunpack.c.l.b16 %v249
    %v877 = vunpack.c.h.b16 %v249
    %v878 = vunpack.c.l.b16 %v250
    %v879 = vunpack.c.h.b16 %v250
    %v880 = vunpack.c.l.b16 %v251
    %v881 = vunpack.c.h.b16 %v251
    %v882 = vunpack.c.l.b16 %v252
    %v883 = vunpack.c.h.b16 %v252
    %v884 = vunpack.c.l.b16 %v253
    %v885 = vunpack.c.h.b16 %v253
    %v886 = vunpack.c.l.b16 %v254
    %v887 = vunpack.c.h.b16 %v254
    %v888 = vunpack.c.l.b16 %v255
    %v889 = vunpack.c.h.b16 %v255
    %v890 = vunpack.c.l.b16 %v256
    %v891 = vunpack.c.h.b16 %v256
    %v892 = vunpack.c.l.b16 %v257
    %v893 = vunpack.c.h.b16 %v257
    %v894 = vunpack.c.l.b16 %v258
    %v895 = vunpack.c.h.b16 %v258
    %v896 = vunpack.c.l.b16 %v259
    %v897 = vunpack.c.h.b16 %v259
    %v898 = vunpack.c.l.b16 %v260
    %v899 = vunpack.c.h.b16 %v260
    %v900 = vunpack.c.l.b16 %v261
    %v901 = vunpack.c.h.b16 %v261
    %v902 = vunpack.c.l.b16 %v262
    %v903 = vunpack.c.h.b16 %v262
    %v904 = vunpack.c.l.b16 %v263
    %v905 = vunpack.c.h.b16 %v263
    %v906 = vunpack.c.l.b16 %v264
    %v907 = vunpack.c.h.b16 %v264
    %v908 = vunpack.c.l.b16 %v265
    %v909 = vunpack.c.h.b16 %v265
    %v910 = vunpack.c.l.b16 %v266
    %v911 = vunpack.c.h.b16 %v266
    %v912 = vunpack.c.l.b16 %v267
    %v913 = vunpack.c.h.b16 %v267
    %v914 = vunpack.c.l.b16 %v268
    %v915 = vunpack.c.h.b16 %v268
    %v916 = vunpack.c.l.b16 %v269
    %v917 = vunpack.c.h.b16 %v269
    %v918 = vunpack.c.l.b16 %v270
    %v919 = vunpack.c.h.b16 %v270
    %v920 = vunpack.c.l.b16 %v271
    %v921 = vunpack.c.h.b16 %v271
    %v922 = vunpack.c.l.b16 %v272
    %v923 = vunpack.c.h.b16 %v272
    %v924 = vunpack.c.l.b16 %v273
    %v925 = vunpack.c.h.b16 %v273
    %v926 = vunpack.c.l.b16 %v274
    %v927 = vunpack.c.h.b16 %v274
    %v928 = vunpack.c.l.b16 %v275
    %v929 = vunpack.c.h.b16 %v275
    %v930 = vunpack.c.l.b16 %v276
    %v931 = vunpack.c.h.b16 %v276
    %v932 = vunpack.c.l.b16 %v277
    %v933 = vunpack.c.h.b16 %v277
    %v934 = vunpack.c.l.b16 %v278
    %v935 = vunpack.c.h.b16 %v278
    %v936 = vunpack.c.l.b16 %v279
    %v937 = vunpack.c.h.b16 %v279
    %v938 = vunpack.c.l.b16 %v280
    %v939 = vunpack.c.h.b16 %v280
    %v940 = vunpack.c.l.b16 %v281
    %v941 = vunpack.c.h.b16 %v281
    %v942 = vunpack.c.l.b16 %v282
    %v943 = vunpack.c.h.b16 %v282
    %v944 = vunpack.c.l.b16 %v283
    %v945 = vunpack.c.h.b16 %v283
    %v946 = vunpack.c.l.b16 %v284
    %v947 = vunpack.c.h.b16 %v284
    %v948 = vunpack.c.l.b16 %v285
    %v949 = vunpack.c.h.b16 %v285
    %v950 = vunpack.c.l.b16 %v286
    %v951 = vunpack.c.h.b16 %v286
    %v952 = vunpack.c.l.b16 %v287
    %v953 = vunpack.c.h.b16 %v287
    %v954 = vunpack.c.l.b16 %v288
    %v955 = vunpack.c.h.b16 %v288
    %v956 = vunpack.c.l.b16 %v289
    %v957 = vunpack.c.h.b16 %v289
    %v958 = vunpack.c.l.b16 %v290
    %v959 = vunpack.c.h.b16 %v290
    %v960 = vunpack.c.l.b16 %v291
    %v961 = vunpack.c.h.b16 %v291
    %v962 = vunpack.c.l.b16 %v292
    %v963 = vunpack.c.h.b16 %v292
    %v964 = vunpack.c.l.b16 %v293
    %v965 = vunpack.c.h.b16 %v293
    %v966 = vunpack.c.l.b16 %v294
    %v967 = vunpack.c.h.b16 %v294
    %v968 = vunpack.c.l.b16 %v295
    %v969 = vunpack.c.h.b16 %v295
    %v970 = vunpack.c.l.b16 %v296
    %v971 = vunpack.c.h.b16 %v296
    %v972 = vunpack.c.l.b16 %v297
    %v973 = vunpack.c.h.b16 %v297
    %v974 = vunpack.c.l.b16 %v298
    %v975 = vunpack.c.h.b16 %v298
    %v976 = vunpack.c.l.b16 %v299
    %v977 = vunpack.c.h.b16 %v299
    %v978 = vunpack.c.l.b16 %v300
    %v979 = vunpack.c.h.b16 %v300
    %v980 = vunpack.c.l.b16 %v301
    %v981 = vunpack.c.h.b16 %v301
    %v982 = vunpack.c.l.b16 %v302
    %v983 = vunpack.c.h.b16 %v302
    %v984 = vunpack.c.l.b16 %v303
    %v985 = vunpack.c.h.b16 %v303
    %v986 = vunpack.c.l.b16 %v304
    %v987 = vunpack.c.h.b16 %v304
    %v988 = vunpack.c.l.b16 %v305
    %v989 = vunpack.c.h.b16 %v305
    %v990 = vunpack.c.l.b16 %v306
    %v991 = vunpack.c.h.b16 %v306
    %v992 = vunpack.c.l.b16 %v307
    %v993 = vunpack.c.h.b16 %v307
    %v994 = vunpack.c.l.b16 %v308
    %v995 = vunpack.c.h.b16 %v308
    %v996 = vunpack.c.l.b16 %v309
    %v997 = vunpack.c.h.b16 %v309
    %v998 = vunpack.c.l.b16 %v310
    %v999 = vunpack.c.h.b16 %v310
    %v1000 = vunpack.c.l.b16 %v311
    %v1001 = vunpack.c.h.b16 %v311
    %v1002 = vunpack.c.l.b16 %v312
    %v1003 = vunpack.c.h.b16 %v312
    %v1004 = vunpack.c.l.b16 %v313
    %v1005 = vunpack.c.h.b16 %v313
    %v1006 = vunpack.c.l.b16 %v314
    %v1007 = vunpack.c.h.b16 %v314
    %v1008 = vunpack.c.l.b16 %v315
    %v1009 = vunpack.c.h.b16 %v315
    %v1010 = vunpack.c.l.b16 %v316
    %v1011 = vunpack.c.h.b16 %v316
    %v1012 = vunpack.c.l.b16 %v317
    %v1013 = vunpack.c.h.b16 %v317
    %v1014 = vunpack.c.l.b16 %v318
    %v1015 = vunpack.c.h.b16 %v318
    %v1016 = vunpack.c.l.b16 %v319
    %v1017 = vunpack.c.h.b16 %v319
    %v1018 = vunpack.c.l.b16 %v320
    %v1019 = vunpack.c.h.b16 %v320
    %v1020 = vunpack.c.l.b16 %v321
    %v1021 = vunpack.c.h.b16 %v321
    %v1022 = vunpack.c.l.b16 %v322
    %v1023 = vunpack.c.h.b16 %v322
    %v1024 = vunpack.c.l.b16 %v323
    %v1025 = vunpack.c.h.b16 %v323
    %v1026 = vunpack.c.l.b16 %v324
    %v1027 = vunpack.c.h.b16 %v324
    %v1028 = vunpack.c.l.b16 %v325
    %v1029 = vunpack.c.h.b16 %v325
    %v1030 = vunpack.c.l.b16 %v326
    %v1031 = vunpack.c.h.b16 %v326
    %v1032 = vunpack.c.l.b16 %v327
    %v1033 = vunpack.c.h.b16 %v327
    %v1034 = vunpack.c.l.b16 %v328
    %v1035 = vunpack.c.h.b16 %v328
    %v1036 = vunpack.c.l.b16 %v329
    %v1037 = vunpack.c.h.b16 %v329
    %v1038 = vunpack.c.l.b16 %v330
    %v1039 = vunpack.c.h.b16 %v330
    %v1040 = vunpack.c.l.b16 %v331
    %v1041 = vunpack.c.h.b16 %v331
    %v1042 = vunpack.c.l.b16 %v332
    %v1043 = vunpack.c.h.b16 %v332
    %v1044 = vunpack.c.l.b16 %v333
    %v1045 = vunpack.c.h.b16 %v333
    %v1046 = vunpack.c.l.b16 %v334
    %v1047 = vunpack.c.h.b16 %v334
    %v1048 = vunpack.c.l.b16 %v335
    %v1049 = vunpack.c.h.b16 %v335
    %v1050 = vunpack.c.l.b16 %v336
    %v1051 = vunpack.c.h.b16 %v336
    %v1052 = vunpack.c.l.b16 %v337
    %v1053 = vunpack.c.h.b16 %v337
    %v1054 = vunpack.c.l.b16 %v338
    %v1055 = vunpack.c.h.b16 %v338
    %v1056 = vunpack.c.l.b16 %v339
    %v1057 = vunpack.c.h.b16 %v339
    %v1058 = vunpack.c.l.b16 %v340
    %v1059 = vunpack.c.h.b16 %v340
    %v1060 = vunpack.c.l.b16 %v341
    %v1061 = vunpack.c.h.b16 %v341
    %v1062 = vunpack.c.l.b16 %v342
    %v1063 = vunpack.c.h.b16 %v342
    %v1064 = vunpack.c.l.b16 %v343
    %v1065 = vunpack.c.h.b16 %v343
    %v1066 = vunpack.c.l.b16 %v344
    %v1067 = vunpack.c.h.b16 %v344
    %v1068 = vunpack.c.l.b16 %v345
    %v1069 = vunpack.c.h.b16 %v345
    %v1070 = vunpack.c.l.b16 %v346
    %v1071 = vunpack.c.h.b16 %v346
    %v1072 = vunpack.c.l.b16 %v347
    %v1073 = vunpack.c.h.b16 %v347
    %v1074 = vunpack.c.l.b16 %v348
    %v1075 = vunpack.c.h.b16 %v348
    %v1076 = vunpack.c.l.b16 %v349
    %v1077 = vunpack.c.h.b16 %v349
    %v1078 = vunpack.c.l.b16 %v350
    %v1079 = vunpack.c.h.b16 %v350
    %v1080 = vunpack.c.l.b16 %v351
    %v1081 = vunpack.c.h.b16 %v351
    %v1082 = vunpack.c.l.b16 %v352
    %v1083 = vunpack.c.h.b16 %v352
    %v1084 = vunpack.c.l.b16 %v353
    %v1085 = vunpack.c.h.b16 %v353
    %v1086 = vunpack.c.l.b16 %v354
    %v1087 = vunpack.c.h.b16 %v354
    %v1088 = vunpack.c.l.b16 %v355
    %v1089 = vunpack.c.h.b16 %v355
    %v1090 = vunpack.c.l.b16 %v356
    %v1091 = vunpack.c.h.b16 %v356
    %v1092 = vunpack.c.l.b16 %v357
    %v1093 = vunpack.c.h.b16 %v357
    %v1094 = vunpack.c.l.b16 %v358
    %v1095 = vunpack.c.h.b16 %v358
    %v1096 = vunpack.c.l.b16 %v359
    %v1097 = vunpack.c.h.b16 %v359
    %v1098 = vunpack.c.l.b16 %v360
    %v1099 = vunpack.c.h.b16 %v360
    %v1100 = vunpack.c.l.b16 %v361
    %v1101 = vunpack.c.h.b16 %v361
    %v1102 = vunpack.c.l.b16 %v362
    %v1103 = vunpack.c.h.b16 %v362
    %v1104 = vunpack.c.l.b16 %v363
    %v1105 = vunpack.c.h.b16 %v363
    %v1106 = vunpack.c.l.b16 %v364
    %v1107 = vunpack.c.h.b16 %v364
    %v1108 = vunpack.c.l.b16 %v365
    %v1109 = vunpack.c.h.b16 %v365
    %v1110 = vunpack.c.l.b16 %v366
    %v1111 = vunpack.c.h.b16 %v366
    %v1112 = vunpack.c.l.b16 %v367
    %v1113 = vunpack.c.h.b16 %v367
    %v1114 = vunpack.c.l.b16 %v368
    %v1115 = vunpack.c.h.b16 %v368
    %v1116 = vunpack.c.l.b16 %v369
    %v1117 = vunpack.c.h.b16 %v369
    %v1118 = vunpack.c.l.b16 %v370
    %v1119 = vunpack.c.h.b16 %v370
    %v1120 = vunpack.c.l.b16 %v371
    %v1121 = vunpack.c.h.b16 %v371
    %v1122 = vunpack.c.l.b16 %v372
    %v1123 = vunpack.c.h.b16 %v372
    %v1124 = vunpack.c.l.b16 %v373
    %v1125 = vunpack.c.h.b16 %v373
    %v1126 = vunpack.c.l.b16 %v374
    %v1127 = vunpack.c.h.b16 %v374
    %v1128 = vunpack.c.l.b16 %v375
    %v1129 = vunpack.c.h.b16 %v375
    %v1130 = vunpack.c.l.b16 %v376
    %v1131 = vunpack.c.h.b16 %v376
    %v1132 = vunpack.c.l.b16 %v377
    %v1133 = vunpack.c.h.b16 %v377
    %v1134 = vunpack.c.l.b16 %v378
    %v1135 = vunpack.c.h.b16 %v378
    %v1136 = vunpack.c.l.b16 %v379
    %v1137 = vunpack.c.h.b16 %v379
    %v1138 = vunpack.c.l.b16 %v380
    %v1139 = vunpack.c.h.b16 %v380
    %v1140 = vunpack.c.l.b16 %v381
    %v1141 = vunpack.c.h.b16 %v381
    %v1142 = vunpack.c.l.b16 %v382
    %v1143 = vunpack.c.h.b16 %v382
    %v1144 = vunpack.c.l.b16 %v383
    %v1145 = vunpack.c.h.b16 %v383
    %v1146 = vunpack.c.l.b16 %v384
    %v1147 = vunpack.c.h.b16 %v384
    %v1148 = vunpack.c.l.b16 %v385
    %v1149 = vunpack.c.h.b16 %v385
    %v1150 = vunpack.c.l.b16 %v386
    %v1151 = vunpack.c.h.b16 %v386
    %v1152 = vunpack.c.l.b16 %v387
    %v1153 = vunpack.c.h.b16 %v387
    %v1154 = vunpack.c.l.b16 %v388
    %v1155 = vunpack.c.h.b16 %v388
    %v1156 = vunpack.c.l.b16 %v389
    %v1157 = vunpack.c.h.b16 %v389
    %v1158 = vunpack.c.l.b16 %v390
    %v1159 = vunpack.c.h.b16 %v390
    %v1160 = vunpack.c.l.b16 %v391
    %v1161 = vunpack.c.h.b16 %v391
    %v1162 = vunpack.c.l.b16 %v392
    %v1163 = vunpack.c.h.b16 %v392
    %v1164 = vunpack.c.l.b16 %v393
    %v1165 = vunpack.c.h.b16 %v393
    %v1166 = vunpack.c.l.b16 %v394
    %v1167 = vunpack.c.h.b16 %v394
    %v1168 = vunpack.c.l.b16 %v395
    %v1169 = vunpack.c.h.b16 %v395
    %v1170 = vunpack.c.l.b16 %v396
    %v1171 = vunpack.c.h.b16 %v396
    %v1172 = vunpack.c.l.b16 %v397
    %v1173 = vunpack.c.h.b16 %v397
    %v1174 = vunpack.c.l.b16 %v398
    %v1175 = vunpack.c.h.b16 %v398
    %v1176 = vunpack.c.l.b16 %v399
    %v1177 = vunpack.c.h.b16 %v399
    %v1178 = vunpack.c.l.b16 %v400
    %v1179 = vunpack.c.h.b16 %v400
    %v1180 = vunpack.c.l.b16 %v401
    %v1181 = vunpack.c.h.b16 %v401
    %v1182 = vunpack.c.l.b16 %v402
    %v1183 = vunpack.c.h.b16 %v402
    %v1184 = vunpack.c.l.b16 %v403
    %v1185 = vunpack.c.h.b16 %v403
    %v1186 = vunpack.c.l.b16 %v404
    %v1187 = vunpack.c.h.b16 %v404
    %v1188 = vunpack.c.l.b16 %v405
    %v1189 = vunpack.c.h.b16 %v405
    %v1190 = vunpack.c.l.b16 %v406
    %v1191 = vunpack.c.h.b16 %v406
    %v1192 = vunpack.c.l.b16 %v407
    %v1193 = vunpack.c.h.b16 %v407
    %v1194 = vunpack.c.l.b16 %v408
    %v1195 = vunpack.c.h.b16 %v408
    %v1196 = vunpack.c.l.b16 %v409
    %v1197 = vunpack.c.h.b16 %v409
    %v1198 = vunpack.c.l.b16 %v410
    %v1199 = vunpack.c.h.b16 %v410
    %v1200 = vunpack.c.l.b16 %v411
    %v1201 = vunpack.c.h.b16 %v411
    %v1202 = vunpack.c.l.b16 %v412
    %v1203 = vunpack.c.h.b16 %v412
    %v1204 = vunpack.c.l.b16 %v413
    %v1205 = vunpack.c.h.b16 %v413
    %v1206 = vunpack.c.l.b16 %v414
    %v1207 = vunpack.c.h.b16 %v414
    %v1208 = vunpack.c.l.b16 %v415
    %v1209 = vunpack.c.h.b16 %v415
    %v1210 = vunpack.c.l.b16 %v416
    %v1211 = vunpack.c.h.b16 %v416
    %v1212 = vunpack.c.l.b16 %v417
    %v1213 = vunpack.c.h.b16 %v417
    %v1214 = vunpack.c.l.b16 %v418
    %v1215 = vunpack.c.h.b16 %v418
    %v1216 = vunpack.c.l.b16 %v419
    %v1217 = vunpack.c.h.b16 %v419
    %v1218 = vunpack.c.l.b16 %v420
    %v1219 = vunpack.c.h.b16 %v420
    %v1220 = vunpack.c.l.b16 %v421
    %v1221 = vunpack.c.h.b16 %v421
    %v1222 = vunpack.c.l.b16 %v422
    %v1223 = vunpack.c.h.b16 %v422
    %v1224 = vunpack.c.l.b16 %v423
    %v1225 = vunpack.c.h.b16 %v423
    %v1226 = vunpack.c.l.b16 %v424
    %v1227 = vunpack.c.h.b16 %v424
    %v1228 = vunpack.c.l.b16 %v425
    %v1229 = vunpack.c.h.b16 %v425
    %v1230 = vunpack.c.l.b16 %v426
    %v1231 = vunpack.c.h.b16 %v426
    %v1232 = vunpack.c.l.b16 %v427
    %v1233 = vunpack.c.h.b16 %v427
    %v1234 = vunpack.c.l.b16 %v428
    %v1235 = vunpack.c.h.b16 %v428
    %v1236 = vunpack.c.l.b16 %v429
    %v1237 = vunpack.c.h.b16 %v429
    %v1238 = vpack.c.b16 %v730, %v726
    %v1239 = vpack.c.b16 %v731, %v727
    %v1240 = vpack.c.b16 %v732, %v728
    %v1241 = vpack.c.b16 %v733, %v729
    %v1242 = vpack.c.b16 %v738, %v734
    %v1243 = vpack.c.b16 %v739, %v735
    %v1244 = vpack.c.b16 %v740, %v736
    %v1245 = vpack.c.b16 %v741, %v737
    %v1246 = vpack.c.b16 %v746, %v742
    %v1247 = vpack.c.b16 %v747, %v743
    %v1248 = vpack.c.b16 %v748, %v744
    %v1249 = vpack.c.b16 %v749, %v745
    %v1250 = vpack.c.b16 %v754, %v750
    %v1251 = vpack.c.b16 %v755, %v751
    %v1252 = vpack.c.b16 %v756, %v752
    %v1253 = vpack.c.b16 %v757, %v753
    %v1254 = vpack.c.b16 %v762, %v758
    %v1255 = vpack.c.b16 %v763, %v759
    %v1256 = vpack.c.b16 %v764, %v760
    %v1257 = vpack.c.b16 %v765, %v761
    %v1258 = vpack.c.b16 %v770, %v766
    %v1259 = vpack.c.b16 %v771, %v767
    %v1260 = vpack.c.b16 %v772, %v768
    %v1261 = vpack.c.b16 %v773, %v769
    %v1262 = vpack.c.b16 %v778, %v774
    %v1263 = vpack.c.b16 %v779, %v775
    %v1264 = vpack.c.b16 %v780, %v776
    %v1265 = vpack.c.b16 %v781, %v777
    %v1266 = vpack.c.b16 %v786, %v782
    %v1267 = vpack.c.b16 %v787, %v783
    %v1268 = vpack.c.b16 %v788, %v784
    %v1269 = vpack.c.b16 %v789, %v785
    %v1270 = vpack.c.b16 %v794, %v790
    %v1271 = vpack.c.b16 %v795, %v791
    %v1272 = vpack.c.b16 %v796, %v792
    %v1273 = vpack.c.b16 %v797, %v793
    %v1274 = vpack.c.b16 %v802, %v798
    %v1275 = vpack.c.b16 %v803, %v799
    %v1276 = vpack.c.b16 %v804, %v800
    %v1277 = vpack.c.b16 %v805, %v801
    %v1278 = vpack.c.b16 %v810, %v806
    %v1279 = vpack.c.b16 %v811, %v807
    %v1280 = vpack.c.b16 %v812, %v808
    %v1281 = vpack.c.b16 %v813, %v809
    %v1282 = vpack.c.b16 %v818, %v814
    %v1283 = vpack.c.b16 %v819, %v815
    %v1284 = vpack.c.b16 %v820, %v816
    %v1285 = vpack.c.b16 %v821, %v817
    %v1286 = vpack.c.b16 %v826, %v822
    %v1287 = vpack.c.b16 %v827, %v823
    %v1288 = vpack.c.b16 %v828, %v824
    %v1289 = vpack.c.b16 %v829, %v825
    %v1290 = vpack.c.b16 %v834, %v830
    %v1291 = vpack.c.b16 %v835, %v831
    %v1292 = vpack.c.b16 %v836, %v832
    %v1293 = vpack.c.b16 %v837, %v833
    %v1294 = vpack.c.b16 %v842, %v838
    %v1295 = vpack.c.b16 %v843, %v839
    %v1296 = vpack.c.b16 %v844, %v840
    %v1297 = vpack.c.b16 %v845, %v841
    %v1298 = vpack.c.b16 %v850, %v846
    %v1299 = vpack.c.b16 %v851, %v847
    %v1300 = vpack.c.b16 %v852, %v848
    %v1301 = vpack.c.b16 %v853, %v849
    %v1302 = vpack.c.b16 %v858, %v854
    %v1303 = vpack.c.b16 %v859, %v855
    %v1304 = vpack.c.b16 %v860, %v856
    %v1305 = vpack.c.b16 %v861, %v857
    %v1306 = vpack.c.b16 %v866, %v862
    %v1307 = vpack.c.b16 %v867, %v863
    %v1308 = vpack.c.b16 %v868, %v864
    %v1309 = vpack.c.b16 %v869, %v865
    %v1310 = vpack.c.b16 %v874, %v870
    %v1311 = vpack.c.b16 %v875, %v871
    %v1312 = vpack.c.b16 %v876, %v872
    %v1313 = vpack.c.b16 %v877, %v873
    %v1314 = vpack.c.b16 %v882, %v878
    %v1315 = vpack.c.b16 %v883, %v879
    %v1316 = vpack.c.b16 %v884, %v880
    %v1317 = vpack.c.b16 %v885, %v881
    %v1318 = vpack.c.b16 %v890, %v886
    %v1319 = vpack.c.b16 %v891, %v887
    %v1320 = vpack.c.b16 %v892, %v888
    %v1321 = vpack.c.b16 %v893, %v889
    %v1322 = vpack.c.b16 %v898, %v894
    %v1323 = vpack.c.b16 %v899, %v895
    %v1324 = vpack.c.b16 %v900, %v896
    %v1325 = vpack.c.b16 %v901, %v897
    %v1326 = vpack.c.b16 %v906, %v902
    %v1327 = vpack.c.b16 %v907, %v903
    %v1328 = vpack.c.b16 %v908, %v904
    %v1329 = vpack.c.b16 %v909, %v905
    %v1330 = vpack.c.b16 %v914, %v910
    %v1331 = vpack.c.b16 %v915, %v911
    %v1332 = vpack.c.b16 %v916, %v912
    %v1333 = vpack.c.b16 %v917, %v913
    %v1334 = vpack.c.b16 %v922, %v918
    %v1335 = vpack.c.b16 %v923, %v919
    %v1336 = vpack.c.b16 %v924, %v920
    %v1337 = vpack.c.b16 %v925, %v921
    %v1338 = vpack.c.b16 %v930, %v926
    %v1339 = vpack.c.b16 %v931, %v927
    %v1340 = vpack.c.b16 %v932, %v928
    %v1341 = vpack.c.b16 %v933, %v929
    %v1342 = vpack.c.b16 %v938, %v934
    %v1343 = vpack.c.b16 %v939, %v935
    %v1344 = vpack.c.b16 %v940, %v936
    %v1345 = vpack.c.b16 %v941, %v937
    %v1346 = vpack.c.b16 %v946, %v942
    %v1347 = vpack.c.b16 %v947, %v943
    %v1348 = vpack.c.b16 %v948, %v944
    %v1349 = vpack.c.b16 %v949, %v945
    %v1350 = vpack.c.b16 %v954, %v950
    %v1351 = vpack.c.b16 %v955, %v951
    %v1352 = vpack.c.b16 %v956, %v952
    %v1353 = vpack.c.b16 %v957, %v953
    %v1354 = vpack.c.b16 %v962, %v958
    %v1355 = vpack.c.b16 %v963, %v959
    %v1356 = vpack.c.b16 %v964, %v960
    %v1357 = vpack.c.b16 %v965, %v961
    %v1358 = vpack.c.b16 %v970, %v966
    %v1359 = vpack.c.b16 %v971, %v967
    %v1360 = vpack.c.b16 %v972, %v968
    %v1361 = vpack.c.b16 %v973, %v969
    %v1362 = vpack.c.b16 %v978, %v974
    %v1363 = vpack.c.b16 %v979, %v975
    %v1364 = vpack.c.b16 %v980, %v976
    %v1365 = vpack.c.b16 %v981, %v977
    %v1366 = vpack.c.b16 %v986, %v982
    %v1367 = vpack.c.b16 %v987, %v983
    %v1368 = vpack.c.b16 %v988, %v984
    %v1369 = vpack.c.b16 %v989, %v985
    %v1370 = vpack.c.b16 %v994, %v990
    %v1371 = vpack.c.b16 %v995, %v991
    %v1372 = vpack.c.b16 %v996, %v992
    %v1373 = vpack.c.b16 %v997, %v993
    %v1374 = vpack.c.b16 %v1002, %v998
    %v1375 = vpack.c.b16 %v1003, %v999
    %v1376 = vpack.c.b16 %v1004, %v1000
    %v1377 = vpack.c.b16 %v1005, %v1001
    %v1378 = vpack.c.b16 %v1010, %v1006
    %v1379 = vpack.c.b16 %v1011, %v1007
    %v1380 = vpack.c.b16 %v1012, %v1008
    %v1381 = vpack.c.b16 %v1013, %v1009
    %v1382 = vpack.c.b16 %v1018, %v1014
    %v1383 = vpack.c.b16 %v1019, %v1015
    %v1384 = vpack.c.b16 %v1020, %v1016
    %v1385 = vpack.c.b16 %v1021, %v1017
    %v1386 = vpack.c.b16 %v1026, %v1022
    %v1387 = vpack.c.b16 %v1027, %v1023
    %v1388 = vpack.c.b16 %v1028, %v1024
    %v1389 = vpack.c.b16 %v1029, %v1025
    %v1390 = vpack.c.b16 %v1034, %v1030
    %v1391 = vpack.c.b16 %v1035, %v1031
    %v1392 = vpack.c.b16 %v1036, %v1032
    %v1393 = vpack.c.b16 %v1037, %v1033
    %v1394 = vpack.c.b16 %v1042, %v1038
    %v1395 = vpack.c.b16 %v1043, %v1039
    %v1396 = vpack.c.b16 %v1044, %v1040
    %v1397 = vpack.c.b16 %v1045, %v1041
    %v1398 = vpack.c.b16 %v1050, %v1046
    %v1399 = vpack.c.b16 %v1051, %v1047
    %v1400 = vpack.c.b16 %v1052, %v1048
    %v1401 = vpack.c.b16 %v1053, %v1049
    %v1402 = vpack.c.b16 %v1058, %v1054
    %v1403 = vpack.c.b16 %v1059, %v1055
    %v1404 = vpack.c.b16 %v1060, %v1056
    %v1405 = vpack.c.b16 %v1061, %v1057
    %v1406 = vpack.c.b16 %v1066, %v1062
    %v1407 = vpack.c.b16 %v1067, %v1063
    %v1408 = vpack.c.b16 %v1068, %v1064
    %v1409 = vpack.c.b16 %v1069, %v1065
    %v1410 = vpack.c.b16 %v1074, %v1070
    %v1411 = vpack.c.b16 %v1075, %v1071
    %v1412 = vpack.c.b16 %v1076, %v1072
    %v1413 = vpack.c.b16 %v1077, %v1073
    %v1414 = vpack.c.b16 %v1082, %v1078
    %v1415 = vpack.c.b16 %v1083, %v1079
    %v1416 = vpack.c.b16 %v1084, %v1080
    %v1417 = vpack.c.b16 %v1085, %v1081
    %v1418 = vpack.c.b16 %v1090, %v1086
    %v1419 = vpack.c.b16 %v1091, %v1087
    %v1420 = vpack.c.b16 %v1092, %v1088
    %v1421 = vpack.c.b16 %v1093, %v1089
    %v1422 = vpack.c.b16 %v1098, %v1094
    %v1423 = vpack.c.b16 %v1099, %v1095
    %v1424 = vpack.c.b16 %v1100, %v1096
    %v1425 = vpack.c.b16 %v1101, %v1097
    %v1426 = vpack.c.b16 %v1106, %v1102
    %v1427 = vpack.c.b16 %v1107, %v1103
    %v1428 = vpack.c.b16 %v1108, %v1104
    %v1429 = vpack.c.b16 %v1109, %v1105
    %v1430 = vpack.c.b16 %v1114, %v1110
    %v1431 = vpack.c.b16 %v1115, %v1111
    %v1432 = vpack.c.b16 %v1116, %v1112
    %v1433 = vpack.c.b16 %v1117, %v1113
    %v1434 = vpack.c.b16 %v1122, %v1118
    %v1435 = vpack.c.b16 %v1123, %v1119
    %v1436 = vpack.c.b16 %v1124, %v1120
    %v1437 = vpack.c.b16 %v1125, %v1121
    %v1438 = vpack.c.b16 %v1130, %v1126
    %v1439 = vpack.c.b16 %v1131, %v1127
    %v1440 = vpack.c.b16 %v1132, %v1128
    %v1441 = vpack.c.b16 %v1133, %v1129
    %v1442 = vpack.c.b16 %v1138, %v1134
    %v1443 = vpack.c.b16 %v1139, %v1135
    %v1444 = vpack.c.b16 %v1140, %v1136
    %v1445 = vpack.c.b16 %v1141, %v1137
    %v1446 = vpack.c.b16 %v1146, %v1142
    %v1447 = vpack.c.b16 %v1147, %v1143
    %v1448 = vpack.c.b16 %v1148, %v1144
    %v1449 = vpack.c.b16 %v1149, %v1145
    %v1450 = vpack.c.b16 %v1154, %v1150
    %v1451 = vpack.c.b16 %v1155, %v1151
    %v1452 = vpack.c.b16 %v1156, %v1152
    %v1453 = vpack.c.b16 %v1157, %v1153
    %v1454 = vpack.c.b16 %v1162, %v1158
    %v1455 = vpack.c.b16 %v1163, %v1159
    %v1456 = vpack.c.b16 %v1164, %v1160
    %v1457 = vpack.c.b16 %v1165, %v1161
    %v1458 = vpack.c.b16 %v1170, %v1166
    %v1459 = vpack.c.b16 %v1171, %v1167
    %v1460 = vpack.c.b16 %v1172, %v1168
    %v1461 = vpack.c.b16 %v1173, %v1169
    %v1462 = vpack.c.b16 %v1178, %v1174
    %v1463 = vpack.c.b16 %v1179, %v1175
    %v1464 = vpack.c.b16 %v1180, %v1176
    %v1465 = vpack.c.b16 %v1181, %v1177
    %v1466 = vpack.c.b16 %v1186, %v1182
    %v1467 = vpack.c.b16 %v1187, %v1183
    %v1468 = vpack.c.b16 %v1188, %v1184
    %v1469 = vpack.c.b16 %v1189, %v1185
    %v1470 = vpack.c.b16 %v1194, %v1190
    %v1471 = vpack.c.b16 %v1195, %v1191
    %v1472 = vpack.c.b16 %v1196, %v1192
    %v1473 = vpack.c.b16 %v1197, %v1193
    %v1474 = vpack.c.b16 %v1202, %v1198
    %v1475 = vpack.c.b16 %v1203, %v1199
    %v1476 = vpack.c.b16 %v1204, %v1200
    %v1477 = vpack.c.b16 %v1205, %v1201
    %v1478 = vpack.c.b16 %v1210, %v1206
    %v1479 = vpack.c.b16 %v1211, %v1207
    %v1480 = vpack.c.b16 %v1212, %v1208
    %v1481 = vpack.c.b16 %v1213, %v1209
    %v1482 = vpack.c.b16 %v1218, %v1214
    %v1483 = vpack.c.b16 %v1219, %v1215
    %v1484 = vpack.c.b16 %v1220, %v1216
    %v1485 = vpack.c.b16 %v1221, %v1217
    %v1486 = vpack.c.b16 %v1226, %v1222
    %v1487 = vpack.c.b16 %v1227, %v1223
    %v1488 = vpack.c.b16 %v1228, %v1224
    %v1489 = vpack.c.b16 %v1229, %v1225
    %v1490 = vpack.c.b16 %v1234, %v1230
    %v1491 = vpack.c.b16 %v1235, %v1231
    %v1492 = vpack.c.b16 %v1236, %v1232
    %v1493 = vpack.c.b16 %v1237, %v1233
    %1750 = vmatprep.subr.bf16.mxu0 %v1239
    %1751 = vmatpush1.bf16.msra.mxu0 %v1238
    %1752 = vmatprep.subr.bf16.mxu0 %v1243
    %1753 = vmatpush1.bf16.msra.mxu0 %v1242
    %1754 = vmatprep.subr.bf16.mxu0 %v1247
    %1755 = vmatpush1.bf16.msra.mxu0 %v1246
    %1756 = vmatprep.subr.bf16.mxu0 %v1251
    %1757 = vmatpush1.bf16.msra.mxu0 %v1250
    %1758 = vmatprep.subr.bf16.mxu0 %v1255
    %1759 = vmatpush1.bf16.msra.mxu0 %v1254
    %1760 = vmatprep.subr.bf16.mxu0 %v1259
    %1761 = vmatpush1.bf16.msra.mxu0 %v1258
    %1762 = vmatprep.subr.bf16.mxu0 %v1263
    %1763 = vmatpush1.bf16.msra.mxu0 %v1262
    %1764 = vmatprep.subr.bf16.mxu0 %v1267
    %1765 = vmatpush1.bf16.msra.mxu0 %v1266
    %1766 = vmatprep.subr.bf16.mxu0 %v1271
    %1767 = vmatpush1.bf16.msra.mxu0 %v1270
    %1768 = vmatprep.subr.bf16.mxu0 %v1275
    %1769 = vmatpush1.bf16.msra.mxu0 %v1274
    %1770 = vmatprep.subr.bf16.mxu0 %v1279
    %1771 = vmatpush1.bf16.msra.mxu0 %v1278
    %1772 = vmatprep.subr.bf16.mxu0 %v1283
    %1773 = vmatpush1.bf16.msra.mxu0 %v1282
    %1774 = vmatprep.subr.bf16.mxu0 %v1287
    %1775 = vmatpush1.bf16.msra.mxu0 %v1286
    %1776 = vmatprep.subr.bf16.mxu0 %v1291
    %1777 = vmatpush1.bf16.msra.mxu0 %v1290
    %1778 = vmatprep.subr.bf16.mxu0 %v1295
    %1779 = vmatpush1.bf16.msra.mxu0 %v1294
    %1780 = vmatprep.subr.bf16.mxu0 %v1299
    %1781 = vmatpush1.bf16.msra.mxu0 %v1298
    %1782 = vmatprep.mubr.bf16.mxu0 %v455
    %1783 = vmatmul.mubr.bf16.gmra.mrb[0].mxu0 %v454
    %v1784 = vpop.f32.mrb[0].mxu0
    %v1785 = vadd.f32 0.0, %v1784
    %v1786 = vpop.f32.mrb[0].mxu0
    %v1787 = vadd.f32 0.0, %v1786
    %v1788 = vpop.f32.mrb[0].mxu0
    %v1789 = vadd.f32 0.0, %v1788
    %v1790 = vpop.f32.mrb[0].mxu0
    %v1791 = vadd.f32 0.0, %v1790
    %1792 = vdwg.mxu0
    %1793 = vmatprep.subr.bf16.mxu0 %v1303
    %1794 = vmatpush1.bf16.msra.mxu0 %v1302
    %1795 = vmatprep.subr.bf16.mxu0 %v1307
    %1796 = vmatpush1.bf16.msra.mxu0 %v1306
    %1797 = vmatprep.subr.bf16.mxu0 %v1311
    %1798 = vmatpush1.bf16.msra.mxu0 %v1310
    %1799 = vmatprep.subr.bf16.mxu0 %v1315
    %1800 = vmatpush1.bf16.msra.mxu0 %v1314
    %1801 = vmatprep.subr.bf16.mxu0 %v1319
    %1802 = vmatpush1.bf16.msra.mxu0 %v1318
    %1803 = vmatprep.subr.bf16.mxu0 %v1323
    %1804 = vmatpush1.bf16.msra.mxu0 %v1322
    %1805 = vmatprep.subr.bf16.mxu0 %v1327
    %1806 = vmatpush1.bf16.msra.mxu0 %v1326
    %1807 = vmatprep.subr.bf16.mxu0 %v1331
    %1808 = vmatpush1.bf16.msra.mxu0 %v1330
    %1809 = vmatprep.subr.bf16.mxu0 %v1335
    %1810 = vmatpush1.bf16.msra.mxu0 %v1334
    %1811 = vmatprep.subr.bf16.mxu0 %v1339
    %1812 = vmatpush1.bf16.msra.mxu0 %v1338
    %1813 = vmatprep.subr.bf16.mxu0 %v1343
    %1814 = vmatpush1.bf16.msra.mxu0 %v1342
    %1815 = vmatprep.subr.bf16.mxu0 %v1347
    %1816 = vmatpush1.bf16.msra.mxu0 %v1346
    %1817 = vmatprep.subr.bf16.mxu0 %v1351
    %1818 = vmatpush1.bf16.msra.mxu0 %v1350
    %1819 = vmatprep.subr.bf16.mxu0 %v1355
    %1820 = vmatpush1.bf16.msra.mxu0 %v1354
    %1821 = vmatprep.subr.bf16.mxu0 %v1359
    %1822 = vmatpush1.bf16.msra.mxu0 %v1358
    %1823 = vmatprep.subr.bf16.mxu0 %v1363
    %1824 = vmatpush1.bf16.msra.mxu0 %v1362
    %1825 = vmatprep.mubr.bf16.mxu0 %v457
    %1826 = vmatmul.mubr.bf16.gmra.mrb[0].mxu0 %v456
    %v1827 = vpop.f32.mrb[0].mxu0
    %v1828 = vadd.f32 %v1785, %v1827
    %v1829 = vpop.f32.mrb[0].mxu0
    %v1830 = vadd.f32 %v1787, %v1829
    %v1831 = vpop.f32.mrb[0].mxu0
    %v1832 = vadd.f32 %v1789, %v1831
    %v1833 = vpop.f32.mrb[0].mxu0
    %v1834 = vadd.f32 %v1791, %v1833
    %1835 = vdwg.mxu0
    %1836 = vmatprep.subr.bf16.mxu0 %v1367
    %1837 = vmatpush1.bf16.msra.mxu0 %v1366
    %1838 = vmatprep.subr.bf16.mxu0 %v1371
    %1839 = vmatpush1.bf16.msra.mxu0 %v1370
    %1840 = vmatprep.subr.bf16.mxu0 %v1375
    %1841 = vmatpush1.bf16.msra.mxu0 %v1374
    %1842 = vmatprep.subr.bf16.mxu0 %v1379
    %1843 = vmatpush1.bf16.msra.mxu0 %v1378
    %1844 = vmatprep.subr.bf16.mxu0 %v1383
    %1845 = vmatpush1.bf16.msra.mxu0 %v1382
    %1846 = vmatprep.subr.bf16.mxu0 %v1387
    %1847 = vmatpush1.bf16.msra.mxu0 %v1386
    %1848 = vmatprep.subr.bf16.mxu0 %v1391
    %1849 = vmatpush1.bf16.msra.mxu0 %v1390
    %1850 = vmatprep.subr.bf16.mxu0 %v1395
    %1851 = vmatpush1.bf16.msra.mxu0 %v1394
    %1852 = vmatprep.subr.bf16.mxu0 %v1399
    %1853 = vmatpush1.bf16.msra.mxu0 %v1398
    %1854 = vmatprep.subr.bf16.mxu0 %v1403
    %1855 = vmatpush1.bf16.msra.mxu0 %v1402
    %1856 = vmatprep.subr.bf16.mxu0 %v1407
    %1857 = vmatpush1.bf16.msra.mxu0 %v1406
    %1858 = vmatprep.subr.bf16.mxu0 %v1411
    %1859 = vmatpush1.bf16.msra.mxu0 %v1410
    %1860 = vmatprep.subr.bf16.mxu0 %v1415
    %1861 = vmatpush1.bf16.msra.mxu0 %v1414
    %1862 = vmatprep.subr.bf16.mxu0 %v1419
    %1863 = vmatpush1.bf16.msra.mxu0 %v1418
    %1864 = vmatprep.subr.bf16.mxu0 %v1423
    %1865 = vmatpush1.bf16.msra.mxu0 %v1422
    %1866 = vmatprep.subr.bf16.mxu0 %v1427
    %1867 = vmatpush1.bf16.msra.mxu0 %v1426
    %1868 = vmatprep.mubr.bf16.mxu0 %v459
    %1869 = vmatmul.mubr.bf16.gmra.mrb[0].mxu0 %v458
    %v1870 = vpop.f32.mrb[0].mxu0
    %v1871 = vadd.f32 %v1828, %v1870
    %v1872 = vpop.f32.mrb[0].mxu0
    %v1873 = vadd.f32 %v1830, %v1872
    %v1874 = vpop.f32.mrb[0].mxu0
    %v1875 = vadd.f32 %v1832, %v1874
    %v1876 = vpop.f32.mrb[0].mxu0
    %v1877 = vadd.f32 %v1834, %v1876
    %1878 = vdwg.mxu0
    %1879 = vmatprep.subr.bf16.mxu0 %v1431
    %1880 = vmatpush1.bf16.msra.mxu0 %v1430
    %1881 = vmatprep.subr.bf16.mxu0 %v1435
    %1882 = vmatpush1.bf16.msra.mxu0 %v1434
    %1883 = vmatprep.subr.bf16.mxu0 %v1439
    %1884 = vmatpush1.bf16.msra.mxu0 %v1438
    %1885 = vmatprep.subr.bf16.mxu0 %v1443
    %1886 = vmatpush1.bf16.msra.mxu0 %v1442
    %1887 = vmatprep.subr.bf16.mxu0 %v1447
    %1888 = vmatpush1.bf16.msra.mxu0 %v1446
    %1889 = vmatprep.subr.bf16.mxu0 %v1451
    %1890 = vmatpush1.bf16.msra.mxu0 %v1450
    %1891 = vmatprep.subr.bf16.mxu0 %v1455
    %1892 = vmatpush1.bf16.msra.mxu0 %v1454
    %1893 = vmatprep.subr.bf16.mxu0 %v1459
    %1894 = vmatpush1.bf16.msra.mxu0 %v1458
    %1895 = vmatprep.subr.bf16.mxu0 %v1463
    %1896 = vmatpush1.bf16.msra.mxu0 %v1462
    %1897 = vmatprep.subr.bf16.mxu0 %v1467
    %1898 = vmatpush1.bf16.msra.mxu0 %v1466
    %1899 = vmatprep.subr.bf16.mxu0 %v1471
    %1900 = vmatpush1.bf16.msra.mxu0 %v1470
    %1901 = vmatprep.subr.bf16.mxu0 %v1475
    %1902 = vmatpush1.bf16.msra.mxu0 %v1474
    %1903 = vmatprep.subr.bf16.mxu0 %v1479
    %1904 = vmatpush1.bf16.msra.mxu0 %v1478
    %1905 = vmatprep.subr.bf16.mxu0 %v1483
    %1906 = vmatpush1.bf16.msra.mxu0 %v1482
    %1907 = vmatprep.subr.bf16.mxu0 %v1487
    %1908 = vmatpush1.bf16.msra.mxu0 %v1486
    %1909 = vmatprep.subr.bf16.mxu0 %v1491
    %1910 = vmatpush1.bf16.msra.mxu0 %v1490
    %1911 = vmatprep.mubr.bf16.mxu0 %v461
    %1912 = vmatmul.mubr.bf16.gmra.mrb[0].mxu0 %v460
    %v1913 = vpop.f32.mrb[0].mxu0
    %v1914 = vadd.f32 %v1871, %v1913
    %v1915 = vpop.f32.mrb[0].mxu0
    %v1916 = vadd.f32 %v1873, %v1915
    %v1917 = vpop.f32.mrb[0].mxu0
    %v1918 = vadd.f32 %v1875, %v1917
    %v1919 = vpop.f32.mrb[0].mxu0
    %v1920 = vadd.f32 %v1877, %v1919
    %1921 = vdwg.mxu0
    %1922 = vmatprep.subr.bf16.mxu0 %v1241
    %1923 = vmatpush1.bf16.msra.mxu0 %v1240
    %1924 = vmatprep.subr.bf16.mxu0 %v1245
    %1925 = vmatpush1.bf16.msra.mxu0 %v1244
    %1926 = vmatprep.subr.bf16.mxu0 %v1249
    %1927 = vmatpush1.bf16.msra.mxu0 %v1248
    %1928 = vmatprep.subr.bf16.mxu0 %v1253
    %1929 = vmatpush1.bf16.msra.mxu0 %v1252
    %1930 = vmatprep.subr.bf16.mxu0 %v1257
    %1931 = vmatpush1.bf16.msra.mxu0 %v1256
    %1932 = vmatprep.subr.bf16.mxu0 %v1261
    %1933 = vmatpush1.bf16.msra.mxu0 %v1260
    %1934 = vmatprep.subr.bf16.mxu0 %v1265
    %1935 = vmatpush1.bf16.msra.mxu0 %v1264
    %1936 = vmatprep.subr.bf16.mxu0 %v1269
    %1937 = vmatpush1.bf16.msra.mxu0 %v1268
    %1938 = vmatprep.subr.bf16.mxu0 %v1273
    %1939 = vmatpush1.bf16.msra.mxu0 %v1272
    %1940 = vmatprep.subr.bf16.mxu0 %v1277
    %1941 = vmatpush1.bf16.msra.mxu0 %v1276
    %1942 = vmatprep.subr.bf16.mxu0 %v1281
    %1943 = vmatpush1.bf16.msra.mxu0 %v1280
    %1944 = vmatprep.subr.bf16.mxu0 %v1285
    %1945 = vmatpush1.bf16.msra.mxu0 %v1284
    %1946 = vmatprep.subr.bf16.mxu0 %v1289
    %1947 = vmatpush1.bf16.msra.mxu0 %v1288
    %1948 = vmatprep.subr.bf16.mxu0 %v1293
    %1949 = vmatpush1.bf16.msra.mxu0 %v1292
    %1950 = vmatprep.subr.bf16.mxu0 %v1297
    %1951 = vmatpush1.bf16.msra.mxu0 %v1296
    %1952 = vmatprep.subr.bf16.mxu0 %v1301
    %1953 = vmatpush1.bf16.msra.mxu0 %v1300
    %1954 = vmatprep.mubr.bf16.mxu0 %v455
    %1955 = vmatmul.mubr.bf16.gmra.mrb[0].mxu0 %v454
    %v1956 = vpop.f32.mrb[0].mxu0
    %v1957 = vadd.f32 0.0, %v1956
    %v1958 = vpop.f32.mrb[0].mxu0
    %v1959 = vadd.f32 0.0, %v1958
    %v1960 = vpop.f32.mrb[0].mxu0
    %v1961 = vadd.f32 0.0, %v1960
    %v1962 = vpop.f32.mrb[0].mxu0
    %v1963 = vadd.f32 0.0, %v1962
    %1964 = vdwg.mxu0
    %1965 = vmatprep.subr.bf16.mxu0 %v1305
    %1966 = vmatpush1.bf16.msra.mxu0 %v1304
    %1967 = vmatprep.subr.bf16.mxu0 %v1309
    %1968 = vmatpush1.bf16.msra.mxu0 %v1308
    %1969 = vmatprep.subr.bf16.mxu0 %v1313
    %1970 = vmatpush1.bf16.msra.mxu0 %v1312
    %1971 = vmatprep.subr.bf16.mxu0 %v1317
    %1972 = vmatpush1.bf16.msra.mxu0 %v1316
    %1973 = vmatprep.subr.bf16.mxu0 %v1321
    %1974 = vmatpush1.bf16.msra.mxu0 %v1320
    %1975 = vmatprep.subr.bf16.mxu0 %v1325
    %1976 = vmatpush1.bf16.msra.mxu0 %v1324
    %1977 = vmatprep.subr.bf16.mxu0 %v1329
    %1978 = vmatpush1.bf16.msra.mxu0 %v1328
    %1979 = vmatprep.subr.bf16.mxu0 %v1333
    %1980 = vmatpush1.bf16.msra.mxu0 %v1332
    %1981 = vmatprep.subr.bf16.mxu0 %v1337
    %1982 = vmatpush1.bf16.msra.mxu0 %v1336
    %1983 = vmatprep.subr.bf16.mxu0 %v1341
    %1984 = vmatpush1.bf16.msra.mxu0 %v1340
    %1985 = vmatprep.subr.bf16.mxu0 %v1345
    %1986 = vmatpush1.bf16.msra.mxu0 %v1344
    %1987 = vmatprep.subr.bf16.mxu0 %v1349
    %1988 = vmatpush1.bf16.msra.mxu0 %v1348
    %1989 = vmatprep.subr.bf16.mxu0 %v1353
    %1990 = vmatpush1.bf16.msra.mxu0 %v1352
    %1991 = vmatprep.subr.bf16.mxu0 %v1357
    %1992 = vmatpush1.bf16.msra.mxu0 %v1356
    %1993 = vmatprep.subr.bf16.mxu0 %v1361
    %1994 = vmatpush1.bf16.msra.mxu0 %v1360
    %1995 = vmatprep.subr.bf16.mxu0 %v1365
    %1996 = vmatpush1.bf16.msra.mxu0 %v1364
    %1997 = vmatprep.mubr.bf16.mxu0 %v457
    %1998 = vmatmul.mubr.bf16.gmra.mrb[0].mxu0 %v456
    %v1999 = vpop.f32.mrb[0].mxu0
    %v2000 = vadd.f32 %v1957, %v1999
    %v2001 = vpop.f32.mrb[0].mxu0
    %v2002 = vadd.f32 %v1959, %v2001
    %v2003 = vpop.f32.mrb[0].mxu0
    %v2004 = vadd.f32 %v1961, %v2003
    %v2005 = vpop.f32.mrb[0].mxu0
    %v2006 = vadd.f32 %v1963, %v2005
    %2007 = vdwg.mxu0
    %2008 = vmatprep.subr.bf16.mxu0 %v1369
    %2009 = vmatpush1.bf16.msra.mxu0 %v1368
    %2010 = vmatprep.subr.bf16.mxu0 %v1373
    %2011 = vmatpush1.bf16.msra.mxu0 %v1372
    %2012 = vmatprep.subr.bf16.mxu0 %v1377
    %2013 = vmatpush1.bf16.msra.mxu0 %v1376
    %2014 = vmatprep.subr.bf16.mxu0 %v1381
    %2015 = vmatpush1.bf16.msra.mxu0 %v1380
    %2016 = vmatprep.subr.bf16.mxu0 %v1385
    %2017 = vmatpush1.bf16.msra.mxu0 %v1384
    %2018 = vmatprep.subr.bf16.mxu0 %v1389
    %2019 = vmatpush1.bf16.msra.mxu0 %v1388
    %2020 = vmatprep.subr.bf16.mxu0 %v1393
    %2021 = vmatpush1.bf16.msra.mxu0 %v1392
    %2022 = vmatprep.subr.bf16.mxu0 %v1397
    %2023 = vmatpush1.bf16.msra.mxu0 %v1396
    %2024 = vmatprep.subr.bf16.mxu0 %v1401
    %2025 = vmatpush1.bf16.msra.mxu0 %v1400
    %2026 = vmatprep.subr.bf16.mxu0 %v1405
    %2027 = vmatpush1.bf16.msra.mxu0 %v1404
    %2028 = vmatprep.subr.bf16.mxu0 %v1409
    %2029 = vmatpush1.bf16.msra.mxu0 %v1408
    %2030 = vmatprep.subr.bf16.mxu0 %v1413
    %2031 = vmatpush1.bf16.msra.mxu0 %v1412
    %2032 = vmatprep.subr.bf16.mxu0 %v1417
    %2033 = vmatpush1.bf16.msra.mxu0 %v1416
    %2034 = vmatprep.subr.bf16.mxu0 %v1421
    %2035 = vmatpush1.bf16.msra.mxu0 %v1420
    %2036 = vmatprep.subr.bf16.mxu0 %v1425
    %2037 = vmatpush1.bf16.msra.mxu0 %v1424
    %2038 = vmatprep.subr.bf16.mxu0 %v1429
    %2039 = vmatpush1.bf16.msra.mxu0 %v1428
    %2040 = vmatprep.mubr.bf16.mxu0 %v459
    %2041 = vmatmul.mubr.bf16.gmra.mrb[0].mxu0 %v458
    %v2042 = vpop.f32.mrb[0].mxu0
    %v2043 = vadd.f32 %v2000, %v2042
    %v2044 = vpop.f32.mrb[0].mxu0
    %v2045 = vadd.f32 %v2002, %v2044
    %v2046 = vpop.f32.mrb[0].mxu0
    %v2047 = vadd.f32 %v2004, %v2046
    %v2048 = vpop.f32.mrb[0].mxu0
    %v2049 = vadd.f32 %v2006, %v2048
    %2050 = vdwg.mxu0
    %2051 = vmatprep.subr.bf16.mxu0 %v1433
    %2052 = vmatpush1.bf16.msra.mxu0 %v1432
    %2053 = vmatprep.subr.bf16.mxu0 %v1437
    %2054 = vmatpush1.bf16.msra.mxu0 %v1436
    %2055 = vmatprep.subr.bf16.mxu0 %v1441
    %2056 = vmatpush1.bf16.msra.mxu0 %v1440
    %2057 = vmatprep.subr.bf16.mxu0 %v1445
    %2058 = vmatpush1.bf16.msra.mxu0 %v1444
    %2059 = vmatprep.subr.bf16.mxu0 %v1449
    %2060 = vmatpush1.bf16.msra.mxu0 %v1448
    %2061 = vmatprep.subr.bf16.mxu0 %v1453
    %2062 = vmatpush1.bf16.msra.mxu0 %v1452
    %2063 = vmatprep.subr.bf16.mxu0 %v1457
    %2064 = vmatpush1.bf16.msra.mxu0 %v1456
    %2065 = vmatprep.subr.bf16.mxu0 %v1461
    %2066 = vmatpush1.bf16.msra.mxu0 %v1460
    %2067 = vmatprep.subr.bf16.mxu0 %v1465
    %2068 = vmatpush1.bf16.msra.mxu0 %v1464
    %2069 = vmatprep.subr.bf16.mxu0 %v1469
    %2070 = vmatpush1.bf16.msra.mxu0 %v1468
    %2071 = vmatprep.subr.bf16.mxu0 %v1473
    %2072 = vmatpush1.bf16.msra.mxu0 %v1472
    %2073 = vmatprep.subr.bf16.mxu0 %v1477
    %2074 = vmatpush1.bf16.msra.mxu0 %v1476
    %2075 = vmatprep.subr.bf16.mxu0 %v1481
    %2076 = vmatpush1.bf16.msra.mxu0 %v1480
    %2077 = vmatprep.subr.bf16.mxu0 %v1485
    %2078 = vmatpush1.bf16.msra.mxu0 %v1484
    %2079 = vmatprep.subr.bf16.mxu0 %v1489
    %2080 = vmatpush1.bf16.msra.mxu0 %v1488
    %2081 = vmatprep.subr.bf16.mxu0 %v1493
    %2082 = vmatpush1.bf16.msra.mxu0 %v1492
    %2083 = vmatprep.mubr.bf16.mxu0 %v461
    %2084 = vmatmul.mubr.bf16.gmra.mrb[0].mxu0 %v460
    %v2085 = vpop.f32.mrb[0].mxu0
    %v2086 = vadd.f32 %v2043, %v2085
    %v2087 = vpop.f32.mrb[0].mxu0
    %v2088 = vadd.f32 %v2045, %v2087
    %v2089 = vpop.f32.mrb[0].mxu0
    %v2090 = vadd.f32 %v2047, %v2089
    %v2091 = vpop.f32.mrb[0].mxu0
    %v2092 = vadd.f32 %v2049, %v2091
    %2093 = vdwg.mxu0
    %v2094 = vadd.f32 %v158, %v1914
    %v2095 = vadd.f32 %v159, %v1916
    %v2096 = vadd.f32 %v160, %v2086
    %v2097 = vadd.f32 %v161, %v2088
    %v2098 = vadd.f32 %v162, %v1918
    %v2099 = vadd.f32 %v163, %v1920
    %v2100 = vadd.f32 %v164, %v2090
    %v2101 = vadd.f32 %v165, %v2092
    %2102 = vst [vmem:[#allocation2] sm:$0xff] %v2094
    %2103 = vst [vmem:[#allocation2 + $0x8] sm:$0xff] %v2095
    %2104 = vst [vmem:[#allocation2 + $0x10] sm:$0xff] %v2096
    %2105 = vst [vmem:[#allocation2 + $0x18] sm:$0xff] %v2097
    %2106 = vst [vmem:[#allocation2 + $0x20] sm:$0xff] %v2098
    %2107 = vst [vmem:[#allocation2 + $0x28] sm:$0xff] %v2099
    %2108 = vst [vmem:[#allocation2 + $0x30] sm:$0xff] %v2100
    %2109 = vst [vmem:[#allocation2 + $0x38] sm:$0xff] %v2101
    // Predicated region
    $region78: #{fcnn_forward.1} parent=1 // pred_check
      %p2110 = pneg %p146
    $region79: #{fcnn_forward.1} parent=1 // pred_check_branch
      %2112 = sbr.rel (%p2110) target = $region81
    $region80: #{fcnn_forward.1} parent=1 // pred_region
      %v2113 = vld [vmem:[#allocation2] sm:$0xff]
      %v2114 = vld [vmem:[#allocation2 + $0x8] sm:$0xff]
      %v2115 = vld [vmem:[#allocation2 + $0x10] sm:$0xff]
      %v2116 = vld [vmem:[#allocation2 + $0x18] sm:$0xff]
      %v2117 = vld [vmem:[#allocation2 + $0x20] sm:$0xff]
      %v2118 = vld [vmem:[#allocation2 + $0x28] sm:$0xff]
      %v2119 = vld [vmem:[#allocation2 + $0x30] sm:$0xff]
      %v2120 = vld [vmem:[#allocation2 + $0x38] sm:$0xff]
      %v2121 = vld [vmem:[#allocation8] sm:$0xf]
      %v2123 = vlaneseq
      %v2124 = vshrl.u32 %v2123, 7
      %v2125 = vsub.s32 0, %v2124
      %v2126 = vrot.slane %v2121, %v2125
      %v2127 = vlaneseq
      %v2128 = vshrl.u32 %v2127, 7
      %v2129 = vsub.s32 1, %v2128
      %v2130 = vrot.slane %v2121, %v2129
      %v2131 = vlaneseq
      %v2132 = vshrl.u32 %v2131, 7
      %v2133 = vsub.s32 2, %v2132
      %v2134 = vrot.slane %v2121, %v2133
      %v2135 = vlaneseq
      %v2136 = vshrl.u32 %v2135, 7
      %v2137 = vsub.s32 3, %v2136
      %v2138 = vrot.slane %v2121, %v2137
      %v2143 = vadd.f32 %v2113, %v2126
      %v2144 = vadd.f32 %v2114, %v2130
      %v2145 = vadd.f32 %v2115, %v2134
      %v2146 = vadd.f32 %v2116, %v2138
      %v2147 = vadd.f32 %v2117, %v2126
      %v2148 = vadd.f32 %v2118, %v2130
      %v2149 = vadd.f32 %v2119, %v2134
      %v2150 = vadd.f32 %v2120, %v2138
      %v2151 = vmax.f32 %v2143, 0.0
      %v2152 = vmax.f32 %v2144, 0.0
      %v2153 = vmax.f32 %v2145, 0.0
      %v2154 = vmax.f32 %v2146, 0.0
      %v2155 = vmax.f32 %v2147, 0.0
      %v2156 = vmax.f32 %v2148, 0.0
      %v2157 = vmax.f32 %v2149, 0.0
      %v2158 = vmax.f32 %v2150, 0.0
      %v2159 = vpack.c.bf16 %v2155, %v2151
      %v2160 = vpack.c.bf16 %v2156, %v2152
      %v2161 = vpack.c.bf16 %v2157, %v2153
      %v2162 = vpack.c.bf16 %v2158, %v2154
      %v2163 = vld [vmem:[#allocation9] sm:$0xff]
      %v2164 = vld [vmem:[#allocation9 + $0x8] sm:$0xff]
      %v2165 = vld [vmem:[#allocation9 + $0x10] sm:$0xff]
      %v2166 = vld [vmem:[#allocation9 + $0x18] sm:$0xff]
      %v2167 = vld [vmem:[#allocation9 + $0x20] sm:$0xff]
      %v2168 = vld [vmem:[#allocation9 + $0x28] sm:$0xff]
      %v2169 = vld [vmem:[#allocation9 + $0x30] sm:$0xff]
      %v2170 = vld [vmem:[#allocation9 + $0x38] sm:$0xff]
      %v2171 = vld [vmem:[#allocation9 + $0x40] sm:$0xff]
      %v2172 = vld [vmem:[#allocation9 + $0x48] sm:$0xff]
      %v2173 = vld [vmem:[#allocation9 + $0x50] sm:$0xff]
      %v2174 = vld [vmem:[#allocation9 + $0x58] sm:$0xff]
      %v2175 = vld [vmem:[#allocation9 + $0x60] sm:$0xff]
      %v2176 = vld [vmem:[#allocation9 + $0x68] sm:$0xff]
      %v2177 = vld [vmem:[#allocation9 + $0x70] sm:$0xff]
      %v2178 = vld [vmem:[#allocation9 + $0x78] sm:$0xff]
      %v2179 = vld [vmem:[#allocation9 + $0x80] sm:$0xff]
      %v2180 = vld [vmem:[#allocation9 + $0x88] sm:$0xff]
      %v2181 = vld [vmem:[#allocation9 + $0x90] sm:$0xff]
      %v2182 = vld [vmem:[#allocation9 + $0x98] sm:$0xff]
      %v2183 = vld [vmem:[#allocation9 + $0xa0] sm:$0xff]
      %v2184 = vld [vmem:[#allocation9 + $0xa8] sm:$0xff]
      %v2185 = vld [vmem:[#allocation9 + $0xb0] sm:$0xff]
      %v2186 = vld [vmem:[#allocation9 + $0xb8] sm:$0xff]
      %v2187 = vld [vmem:[#allocation9 + $0xc0] sm:$0xff]
      %v2188 = vld [vmem:[#allocation9 + $0xc8] sm:$0xff]
      %v2189 = vld [vmem:[#allocation9 + $0xd0] sm:$0xff]
      %v2190 = vld [vmem:[#allocation9 + $0xd8] sm:$0xff]
      %v2191 = vld [vmem:[#allocation9 + $0xe0] sm:$0xff]
      %v2192 = vld [vmem:[#allocation9 + $0xe8] sm:$0xff]
      %v2193 = vld [vmem:[#allocation9 + $0xf0] sm:$0xff]
      %v2194 = vld [vmem:[#allocation9 + $0xf8] sm:$0xff]
      %v2195 = vld [vmem:[#allocation9 + $0x100] sm:$0xff]
      %v2196 = vld [vmem:[#allocation9 + $0x108] sm:$0xff]
      %v2197 = vld [vmem:[#allocation9 + $0x110] sm:$0xff]
      %v2198 = vld [vmem:[#allocation9 + $0x118] sm:$0xff]
      %v2199 = vld [vmem:[#allocation9 + $0x120] sm:$0xff]
      %v2200 = vld [vmem:[#allocation9 + $0x128] sm:$0xff]
      %v2201 = vld [vmem:[#allocation9 + $0x130] sm:$0xff]
      %v2202 = vld [vmem:[#allocation9 + $0x138] sm:$0xff]
      %v2203 = vld [vmem:[#allocation9 + $0x140] sm:$0xff]
      %v2204 = vld [vmem:[#allocation9 + $0x148] sm:$0xff]
      %v2205 = vld [vmem:[#allocation9 + $0x150] sm:$0xff]
      %v2206 = vld [vmem:[#allocation9 + $0x158] sm:$0xff]
      %v2207 = vld [vmem:[#allocation9 + $0x160] sm:$0xff]
      %v2208 = vld [vmem:[#allocation9 + $0x168] sm:$0xff]
      %v2209 = vld [vmem:[#allocation9 + $0x170] sm:$0xff]
      %v2210 = vld [vmem:[#allocation9 + $0x178] sm:$0xff]
      %v2211 = vld [vmem:[#allocation9 + $0x180] sm:$0xff]
      %v2212 = vld [vmem:[#allocation9 + $0x188] sm:$0xff]
      %v2213 = vld [vmem:[#allocation9 + $0x190] sm:$0xff]
      %v2214 = vld [vmem:[#allocation9 + $0x198] sm:$0xff]
      %v2215 = vld [vmem:[#allocation9 + $0x1a0] sm:$0xff]
      %v2216 = vld [vmem:[#allocation9 + $0x1a8] sm:$0xff]
      %v2217 = vld [vmem:[#allocation9 + $0x1b0] sm:$0xff]
      %v2218 = vld [vmem:[#allocation9 + $0x1b8] sm:$0xff]
      %v2219 = vld [vmem:[#allocation9 + $0x1c0] sm:$0xff]
      %v2220 = vld [vmem:[#allocation9 + $0x1c8] sm:$0xff]
      %v2221 = vld [vmem:[#allocation9 + $0x1d0] sm:$0xff]
      %v2222 = vld [vmem:[#allocation9 + $0x1d8] sm:$0xff]
      %v2223 = vld [vmem:[#allocation9 + $0x1e0] sm:$0xff]
      %v2224 = vld [vmem:[#allocation9 + $0x1e8] sm:$0xff]
      %v2225 = vld [vmem:[#allocation9 + $0x1f0] sm:$0xff]
      %v2226 = vld [vmem:[#allocation9 + $0x1f8] sm:$0xff]
      %v2227 = vld [vmem:[#allocation11] sm:$0x3]
      %v2229 = vlaneseq
      %v2230 = vshrl.u32 %v2229, 7
      %v2231 = vsub.s32 0, %v2230
      %v2232 = vrot.slane %v2227, %v2231
      %v2233 = vlaneseq
      %v2234 = vshrl.u32 %v2233, 7
      %v2235 = vsub.s32 1, %v2234
      %v2236 = vrot.slane %v2227, %v2235
      %v2303 = vunpack.c.l.b16 %v2163
      %v2304 = vunpack.c.h.b16 %v2163
      %v2305 = vunpack.c.l.b16 %v2164
      %v2306 = vunpack.c.h.b16 %v2164
      %v2307 = vunpack.c.l.b16 %v2165
      %v2308 = vunpack.c.h.b16 %v2165
      %v2309 = vunpack.c.l.b16 %v2166
      %v2310 = vunpack.c.h.b16 %v2166
      %v2311 = vunpack.c.l.b16 %v2167
      %v2312 = vunpack.c.h.b16 %v2167
      %v2313 = vunpack.c.l.b16 %v2168
      %v2314 = vunpack.c.h.b16 %v2168
      %v2315 = vunpack.c.l.b16 %v2169
      %v2316 = vunpack.c.h.b16 %v2169
      %v2317 = vunpack.c.l.b16 %v2170
      %v2318 = vunpack.c.h.b16 %v2170
      %v2319 = vunpack.c.l.b16 %v2171
      %v2320 = vunpack.c.h.b16 %v2171
      %v2321 = vunpack.c.l.b16 %v2172
      %v2322 = vunpack.c.h.b16 %v2172
      %v2323 = vunpack.c.l.b16 %v2173
      %v2324 = vunpack.c.h.b16 %v2173
      %v2325 = vunpack.c.l.b16 %v2174
      %v2326 = vunpack.c.h.b16 %v2174
      %v2327 = vunpack.c.l.b16 %v2175
      %v2328 = vunpack.c.h.b16 %v2175
      %v2329 = vunpack.c.l.b16 %v2176
      %v2330 = vunpack.c.h.b16 %v2176
      %v2331 = vunpack.c.l.b16 %v2177
      %v2332 = vunpack.c.h.b16 %v2177
      %v2333 = vunpack.c.l.b16 %v2178
      %v2334 = vunpack.c.h.b16 %v2178
      %v2335 = vunpack.c.l.b16 %v2179
      %v2336 = vunpack.c.h.b16 %v2179
      %v2337 = vunpack.c.l.b16 %v2180
      %v2338 = vunpack.c.h.b16 %v2180
      %v2339 = vunpack.c.l.b16 %v2181
      %v2340 = vunpack.c.h.b16 %v2181
      %v2341 = vunpack.c.l.b16 %v2182
      %v2342 = vunpack.c.h.b16 %v2182
      %v2343 = vunpack.c.l.b16 %v2183
      %v2344 = vunpack.c.h.b16 %v2183
      %v2345 = vunpack.c.l.b16 %v2184
      %v2346 = vunpack.c.h.b16 %v2184
      %v2347 = vunpack.c.l.b16 %v2185
      %v2348 = vunpack.c.h.b16 %v2185
      %v2349 = vunpack.c.l.b16 %v2186
      %v2350 = vunpack.c.h.b16 %v2186
      %v2351 = vunpack.c.l.b16 %v2187
      %v2352 = vunpack.c.h.b16 %v2187
      %v2353 = vunpack.c.l.b16 %v2188
      %v2354 = vunpack.c.h.b16 %v2188
      %v2355 = vunpack.c.l.b16 %v2189
      %v2356 = vunpack.c.h.b16 %v2189
      %v2357 = vunpack.c.l.b16 %v2190
      %v2358 = vunpack.c.h.b16 %v2190
      %v2359 = vunpack.c.l.b16 %v2191
      %v2360 = vunpack.c.h.b16 %v2191
      %v2361 = vunpack.c.l.b16 %v2192
      %v2362 = vunpack.c.h.b16 %v2192
      %v2363 = vunpack.c.l.b16 %v2193
      %v2364 = vunpack.c.h.b16 %v2193
      %v2365 = vunpack.c.l.b16 %v2194
      %v2366 = vunpack.c.h.b16 %v2194
      %v2367 = vunpack.c.l.b16 %v2195
      %v2368 = vunpack.c.h.b16 %v2195
      %v2369 = vunpack.c.l.b16 %v2196
      %v2370 = vunpack.c.h.b16 %v2196
      %v2371 = vunpack.c.l.b16 %v2197
      %v2372 = vunpack.c.h.b16 %v2197
      %v2373 = vunpack.c.l.b16 %v2198
      %v2374 = vunpack.c.h.b16 %v2198
      %v2375 = vunpack.c.l.b16 %v2199
      %v2376 = vunpack.c.h.b16 %v2199
      %v2377 = vunpack.c.l.b16 %v2200
      %v2378 = vunpack.c.h.b16 %v2200
      %v2379 = vunpack.c.l.b16 %v2201
      %v2380 = vunpack.c.h.b16 %v2201
      %v2381 = vunpack.c.l.b16 %v2202
      %v2382 = vunpack.c.h.b16 %v2202
      %v2383 = vunpack.c.l.b16 %v2203
      %v2384 = vunpack.c.h.b16 %v2203
      %v2385 = vunpack.c.l.b16 %v2204
      %v2386 = vunpack.c.h.b16 %v2204
      %v2387 = vunpack.c.l.b16 %v2205
      %v2388 = vunpack.c.h.b16 %v2205
      %v2389 = vunpack.c.l.b16 %v2206
      %v2390 = vunpack.c.h.b16 %v2206
      %v2391 = vunpack.c.l.b16 %v2207
      %v2392 = vunpack.c.h.b16 %v2207
      %v2393 = vunpack.c.l.b16 %v2208
      %v2394 = vunpack.c.h.b16 %v2208
      %v2395 = vunpack.c.l.b16 %v2209
      %v2396 = vunpack.c.h.b16 %v2209
      %v2397 = vunpack.c.l.b16 %v2210
      %v2398 = vunpack.c.h.b16 %v2210
      %v2399 = vunpack.c.l.b16 %v2211
      %v2400 = vunpack.c.h.b16 %v2211
      %v2401 = vunpack.c.l.b16 %v2212
      %v2402 = vunpack.c.h.b16 %v2212
      %v2403 = vunpack.c.l.b16 %v2213
      %v2404 = vunpack.c.h.b16 %v2213
      %v2405 = vunpack.c.l.b16 %v2214
      %v2406 = vunpack.c.h.b16 %v2214
      %v2407 = vunpack.c.l.b16 %v2215
      %v2408 = vunpack.c.h.b16 %v2215
      %v2409 = vunpack.c.l.b16 %v2216
      %v2410 = vunpack.c.h.b16 %v2216
      %v2411 = vunpack.c.l.b16 %v2217
      %v2412 = vunpack.c.h.b16 %v2217
      %v2413 = vunpack.c.l.b16 %v2218
      %v2414 = vunpack.c.h.b16 %v2218
      %v2415 = vunpack.c.l.b16 %v2219
      %v2416 = vunpack.c.h.b16 %v2219
      %v2417 = vunpack.c.l.b16 %v2220
      %v2418 = vunpack.c.h.b16 %v2220
      %v2419 = vunpack.c.l.b16 %v2221
      %v2420 = vunpack.c.h.b16 %v2221
      %v2421 = vunpack.c.l.b16 %v2222
      %v2422 = vunpack.c.h.b16 %v2222
      %v2423 = vunpack.c.l.b16 %v2223
      %v2424 = vunpack.c.h.b16 %v2223
      %v2425 = vunpack.c.l.b16 %v2224
      %v2426 = vunpack.c.h.b16 %v2224
      %v2427 = vunpack.c.l.b16 %v2225
      %v2428 = vunpack.c.h.b16 %v2225
      %v2429 = vunpack.c.l.b16 %v2226
      %v2430 = vunpack.c.h.b16 %v2226
      %v2431 = vpack.c.b16 %v2305, %v2303
      %v2432 = vpack.c.b16 %v2306, %v2304
      %v2433 = vpack.c.b16 %v2309, %v2307
      %v2434 = vpack.c.b16 %v2310, %v2308
      %v2435 = vpack.c.b16 %v2313, %v2311
      %v2436 = vpack.c.b16 %v2314, %v2312
      %v2437 = vpack.c.b16 %v2317, %v2315
      %v2438 = vpack.c.b16 %v2318, %v2316
      %v2439 = vpack.c.b16 %v2321, %v2319
      %v2440 = vpack.c.b16 %v2322, %v2320
      %v2441 = vpack.c.b16 %v2325, %v2323
      %v2442 = vpack.c.b16 %v2326, %v2324
      %v2443 = vpack.c.b16 %v2329, %v2327
      %v2444 = vpack.c.b16 %v2330, %v2328
      %v2445 = vpack.c.b16 %v2333, %v2331
      %v2446 = vpack.c.b16 %v2334, %v2332
      %v2447 = vpack.c.b16 %v2337, %v2335
      %v2448 = vpack.c.b16 %v2338, %v2336
      %v2449 = vpack.c.b16 %v2341, %v2339
      %v2450 = vpack.c.b16 %v2342, %v2340
      %v2451 = vpack.c.b16 %v2345, %v2343
      %v2452 = vpack.c.b16 %v2346, %v2344
      %v2453 = vpack.c.b16 %v2349, %v2347
      %v2454 = vpack.c.b16 %v2350, %v2348
      %v2455 = vpack.c.b16 %v2353, %v2351
      %v2456 = vpack.c.b16 %v2354, %v2352
      %v2457 = vpack.c.b16 %v2357, %v2355
      %v2458 = vpack.c.b16 %v2358, %v2356
      %v2459 = vpack.c.b16 %v2361, %v2359
      %v2460 = vpack.c.b16 %v2362, %v2360
      %v2461 = vpack.c.b16 %v2365, %v2363
      %v2462 = vpack.c.b16 %v2366, %v2364
      %v2463 = vpack.c.b16 %v2369, %v2367
      %v2464 = vpack.c.b16 %v2370, %v2368
      %v2465 = vpack.c.b16 %v2373, %v2371
      %v2466 = vpack.c.b16 %v2374, %v2372
      %v2467 = vpack.c.b16 %v2377, %v2375
      %v2468 = vpack.c.b16 %v2378, %v2376
      %v2469 = vpack.c.b16 %v2381, %v2379
      %v2470 = vpack.c.b16 %v2382, %v2380
      %v2471 = vpack.c.b16 %v2385, %v2383
      %v2472 = vpack.c.b16 %v2386, %v2384
      %v2473 = vpack.c.b16 %v2389, %v2387
      %v2474 = vpack.c.b16 %v2390, %v2388
      %v2475 = vpack.c.b16 %v2393, %v2391
      %v2476 = vpack.c.b16 %v2394, %v2392
      %v2477 = vpack.c.b16 %v2397, %v2395
      %v2478 = vpack.c.b16 %v2398, %v2396
      %v2479 = vpack.c.b16 %v2401, %v2399
      %v2480 = vpack.c.b16 %v2402, %v2400
      %v2481 = vpack.c.b16 %v2405, %v2403
      %v2482 = vpack.c.b16 %v2406, %v2404
      %v2483 = vpack.c.b16 %v2409, %v2407
      %v2484 = vpack.c.b16 %v2410, %v2408
      %v2485 = vpack.c.b16 %v2413, %v2411
      %v2486 = vpack.c.b16 %v2414, %v2412
      %v2487 = vpack.c.b16 %v2417, %v2415
      %v2488 = vpack.c.b16 %v2418, %v2416
      %v2489 = vpack.c.b16 %v2421, %v2419
      %v2490 = vpack.c.b16 %v2422, %v2420
      %v2491 = vpack.c.b16 %v2425, %v2423
      %v2492 = vpack.c.b16 %v2426, %v2424
      %v2493 = vpack.c.b16 %v2429, %v2427
      %v2494 = vpack.c.b16 %v2430, %v2428
      %2559 = vmatprep.subr.bf16.mxu0 %v2432
      %2560 = vmatpush1.bf16.msra.mxu0 %v2431
      %2561 = vmatprep.subr.bf16.mxu0 %v2434
      %2562 = vmatpush1.bf16.msra.mxu0 %v2433
      %2563 = vmatprep.subr.bf16.mxu0 %v2436
      %2564 = vmatpush1.bf16.msra.mxu0 %v2435
      %2565 = vmatprep.subr.bf16.mxu0 %v2438
      %2566 = vmatpush1.bf16.msra.mxu0 %v2437
      %2567 = vmatprep.subr.bf16.mxu0 %v2440
      %2568 = vmatpush1.bf16.msra.mxu0 %v2439
      %2569 = vmatprep.subr.bf16.mxu0 %v2442
      %2570 = vmatpush1.bf16.msra.mxu0 %v2441
      %2571 = vmatprep.subr.bf16.mxu0 %v2444
      %2572 = vmatpush1.bf16.msra.mxu0 %v2443
      %2573 = vmatprep.subr.bf16.mxu0 %v2446
      %2574 = vmatpush1.bf16.msra.mxu0 %v2445
      %2575 = vmatprep.subr.bf16.mxu0 %v2448
      %2576 = vmatpush1.bf16.msra.mxu0 %v2447
      %2577 = vmatprep.subr.bf16.mxu0 %v2450
      %2578 = vmatpush1.bf16.msra.mxu0 %v2449
      %2579 = vmatprep.subr.bf16.mxu0 %v2452
      %2580 = vmatpush1.bf16.msra.mxu0 %v2451
      %2581 = vmatprep.subr.bf16.mxu0 %v2454
      %2582 = vmatpush1.bf16.msra.mxu0 %v2453
      %2583 = vmatprep.subr.bf16.mxu0 %v2456
      %2584 = vmatpush1.bf16.msra.mxu0 %v2455
      %2585 = vmatprep.subr.bf16.mxu0 %v2458
      %2586 = vmatpush1.bf16.msra.mxu0 %v2457
      %2587 = vmatprep.subr.bf16.mxu0 %v2460
      %2588 = vmatpush1.bf16.msra.mxu0 %v2459
      %2589 = vmatprep.subr.bf16.mxu0 %v2462
      %2590 = vmatpush1.bf16.msra.mxu0 %v2461
      %2591 = vmatprep.mubr.bf16.mxu0 %v2160
      %2592 = vmatmul.mubr.bf16.gmra.mrb[0].mxu0 %v2159
      %v2593 = vpop.f32.mrb[0].mxu0
      %v2594 = vadd.f32 %v2232, %v2593
      %v2595 = vpop.f32.mrb[0].mxu0
      %v2596 = vadd.f32 %v2236, %v2595
      %v2597 = vpop.f32.mrb[0].mxu0
      %v2598 = vadd.f32 %v2232, %v2597
      %v2599 = vpop.f32.mrb[0].mxu0
      %v2600 = vadd.f32 %v2236, %v2599
      %2601 = vdwg.mxu0
      %2602 = vmatprep.subr.bf16.mxu0 %v2464
      %2603 = vmatpush1.bf16.msra.mxu0 %v2463
      %2604 = vmatprep.subr.bf16.mxu0 %v2466
      %2605 = vmatpush1.bf16.msra.mxu0 %v2465
      %2606 = vmatprep.subr.bf16.mxu0 %v2468
      %2607 = vmatpush1.bf16.msra.mxu0 %v2467
      %2608 = vmatprep.subr.bf16.mxu0 %v2470
      %2609 = vmatpush1.bf16.msra.mxu0 %v2469
      %2610 = vmatprep.subr.bf16.mxu0 %v2472
      %2611 = vmatpush1.bf16.msra.mxu0 %v2471
      %2612 = vmatprep.subr.bf16.mxu0 %v2474
      %2613 = vmatpush1.bf16.msra.mxu0 %v2473
      %2614 = vmatprep.subr.bf16.mxu0 %v2476
      %2615 = vmatpush1.bf16.msra.mxu0 %v2475
      %2616 = vmatprep.subr.bf16.mxu0 %v2478
      %2617 = vmatpush1.bf16.msra.mxu0 %v2477
      %2618 = vmatprep.subr.bf16.mxu0 %v2480
      %2619 = vmatpush1.bf16.msra.mxu0 %v2479
      %2620 = vmatprep.subr.bf16.mxu0 %v2482
      %2621 = vmatpush1.bf16.msra.mxu0 %v2481
      %2622 = vmatprep.subr.bf16.mxu0 %v2484
      %2623 = vmatpush1.bf16.msra.mxu0 %v2483
      %2624 = vmatprep.subr.bf16.mxu0 %v2486
      %2625 = vmatpush1.bf16.msra.mxu0 %v2485
      %2626 = vmatprep.subr.bf16.mxu0 %v2488
      %2627 = vmatpush1.bf16.msra.mxu0 %v2487
      %2628 = vmatprep.subr.bf16.mxu0 %v2490
      %2629 = vmatpush1.bf16.msra.mxu0 %v2489
      %2630 = vmatprep.subr.bf16.mxu0 %v2492
      %2631 = vmatpush1.bf16.msra.mxu0 %v2491
      %2632 = vmatprep.subr.bf16.mxu0 %v2494
      %2633 = vmatpush1.bf16.msra.mxu0 %v2493
      %2634 = vmatprep.mubr.bf16.mxu0 %v2162
      %2635 = vmatmul.mubr.bf16.gmra.mrb[0].mxu0 %v2161
      %v2636 = vpop.f32.mrb[0].mxu0
      %v2637 = vadd.f32 %v2594, %v2636
      %v2638 = vpop.f32.mrb[0].mxu0
      %v2639 = vadd.f32 %v2596, %v2638
      %v2640 = vpop.f32.mrb[0].mxu0
      %v2641 = vadd.f32 %v2598, %v2640
      %v2642 = vpop.f32.mrb[0].mxu0
      %v2643 = vadd.f32 %v2600, %v2642
      %2644 = vdwg.mxu0
      %v2645 = vmax.f32 %v2637, 0.0
      %v2646 = vmax.f32 %v2639, 0.0
      %v2647 = vmax.f32 %v2641, 0.0
      %v2648 = vmax.f32 %v2643, 0.0
      %v2649 = vpack.c.bf16 %v2647, %v2645
      %v2650 = vpack.c.bf16 %v2648, %v2646
      %v2651 = vld [vmem:[#allocation12] sm:$0xf]
      %v2652 = vld [vmem:[#allocation12 + $0x4] sm:$0xf]
      %v2653 = vld [vmem:[#allocation12 + $0x8] sm:$0xf]
      %v2654 = vld [vmem:[#allocation12 + $0xc] sm:$0xf]
      %v2655 = vld [vmem:[#allocation12 + $0x10] sm:$0xf]
      %v2656 = vld [vmem:[#allocation12 + $0x14] sm:$0xf]
      %v2657 = vld [vmem:[#allocation12 + $0x18] sm:$0xf]
      %v2658 = vld [vmem:[#allocation12 + $0x1c] sm:$0xf]
      %v2659 = vld [vmem:[#allocation12 + $0x20] sm:$0xf]
      %v2660 = vld [vmem:[#allocation12 + $0x24] sm:$0xf]
      %v2661 = vld [vmem:[#allocation12 + $0x28] sm:$0xf]
      %v2662 = vld [vmem:[#allocation12 + $0x2c] sm:$0xf]
      %v2663 = vld [vmem:[#allocation12 + $0x30] sm:$0xf]
      %v2664 = vld [vmem:[#allocation12 + $0x34] sm:$0xf]
      %v2665 = vld [vmem:[#allocation12 + $0x38] sm:$0xf]
      %v2666 = vld [vmem:[#allocation12 + $0x3c] sm:$0xf]
      %v2667 = vld [vmem:[#allocation12 + $0x40] sm:$0xf]
      %v2668 = vld [vmem:[#allocation12 + $0x44] sm:$0xf]
      %v2669 = vld [vmem:[#allocation12 + $0x48] sm:$0xf]
      %v2670 = vld [vmem:[#allocation12 + $0x4c] sm:$0xf]
      %v2671 = vld [vmem:[#allocation12 + $0x50] sm:$0xf]
      %v2672 = vld [vmem:[#allocation12 + $0x54] sm:$0xf]
      %v2673 = vld [vmem:[#allocation12 + $0x58] sm:$0xf]
      %v2674 = vld [vmem:[#allocation12 + $0x5c] sm:$0xf]
      %v2675 = vld [vmem:[#allocation12 + $0x60] sm:$0xf]
      %v2676 = vld [vmem:[#allocation12 + $0x64] sm:$0xf]
      %v2677 = vld [vmem:[#allocation12 + $0x68] sm:$0xf]
      %v2678 = vld [vmem:[#allocation12 + $0x6c] sm:$0xf]
      %v2679 = vld [vmem:[#allocation12 + $0x70] sm:$0xf]
      %v2680 = vld [vmem:[#allocation12 + $0x74] sm:$0xf]
      %v2681 = vld [vmem:[#allocation12 + $0x78] sm:$0xf]
      %v2682 = vld [vmem:[#allocation12 + $0x7c] sm:$0xf]
      %v2683 = vld [vmem:[#allocation14] sm:$0x1]
      %v2685 = vlaneseq
      %v2686 = vshrl.u32 %v2685, 7
      %v2687 = vsub.s32 0, %v2686
      %v2688 = vrot.slane %v2683, %v2687
      %v2722 = vunpack.c.l.b16 %v2651
      %v2723 = vunpack.c.l.b16 %v2652
      %v2724 = vunpack.c.l.b16 %v2653
      %v2725 = vunpack.c.l.b16 %v2654
      %v2726 = vunpack.c.l.b16 %v2655
      %v2727 = vunpack.c.l.b16 %v2656
      %v2728 = vunpack.c.l.b16 %v2657
      %v2729 = vunpack.c.l.b16 %v2658
      %v2730 = vunpack.c.l.b16 %v2659
      %v2731 = vunpack.c.l.b16 %v2660
      %v2732 = vunpack.c.l.b16 %v2661
      %v2733 = vunpack.c.l.b16 %v2662
      %v2734 = vunpack.c.l.b16 %v2663
      %v2735 = vunpack.c.l.b16 %v2664
      %v2736 = vunpack.c.l.b16 %v2665
      %v2737 = vunpack.c.l.b16 %v2666
      %v2738 = vunpack.c.l.b16 %v2667
      %v2739 = vunpack.c.l.b16 %v2668
      %v2740 = vunpack.c.l.b16 %v2669
      %v2741 = vunpack.c.l.b16 %v2670
      %v2742 = vunpack.c.l.b16 %v2671
      %v2743 = vunpack.c.l.b16 %v2672
      %v2744 = vunpack.c.l.b16 %v2673
      %v2745 = vunpack.c.l.b16 %v2674
      %v2746 = vunpack.c.l.b16 %v2675
      %v2747 = vunpack.c.l.b16 %v2676
      %v2748 = vunpack.c.l.b16 %v2677
      %v2749 = vunpack.c.l.b16 %v2678
      %v2750 = vunpack.c.l.b16 %v2679
      %v2751 = vunpack.c.l.b16 %v2680
      %v2752 = vunpack.c.l.b16 %v2681
      %v2753 = vunpack.c.l.b16 %v2682
      %v2754 = vpack.c.b16 %v2723, %v2722
      %v2755 = vpack.c.b16 %v2725, %v2724
      %v2756 = vpack.c.b16 %v2727, %v2726
      %v2757 = vpack.c.b16 %v2729, %v2728
      %v2758 = vpack.c.b16 %v2731, %v2730
      %v2759 = vpack.c.b16 %v2733, %v2732
      %v2760 = vpack.c.b16 %v2735, %v2734
      %v2761 = vpack.c.b16 %v2737, %v2736
      %v2762 = vpack.c.b16 %v2739, %v2738
      %v2763 = vpack.c.b16 %v2741, %v2740
      %v2764 = vpack.c.b16 %v2743, %v2742
      %v2765 = vpack.c.b16 %v2745, %v2744
      %v2766 = vpack.c.b16 %v2747, %v2746
      %v2767 = vpack.c.b16 %v2749, %v2748
      %v2768 = vpack.c.b16 %v2751, %v2750
      %v2769 = vpack.c.b16 %v2753, %v2752
      %2786 = vmatprep.subr.bf16.mxu0 0
      %2787 = vmatpush1.bf16.msra.mxu0 %v2754
      %2788 = vmatprep.subr.bf16.mxu0 0
      %2789 = vmatpush1.bf16.msra.mxu0 %v2755
      %2790 = vmatprep.subr.bf16.mxu0 0
      %2791 = vmatpush1.bf16.msra.mxu0 %v2756
      %2792 = vmatprep.subr.bf16.mxu0 0
      %2793 = vmatpush1.bf16.msra.mxu0 %v2757
      %2794 = vmatprep.subr.bf16.mxu0 0
      %2795 = vmatpush1.bf16.msra.mxu0 %v2758
      %2796 = vmatprep.subr.bf16.mxu0 0
      %2797 = vmatpush1.bf16.msra.mxu0 %v2759
      %2798 = vmatprep.subr.bf16.mxu0 0
      %2799 = vmatpush1.bf16.msra.mxu0 %v2760
      %2800 = vmatprep.subr.bf16.mxu0 0
      %2801 = vmatpush1.bf16.msra.mxu0 %v2761
      %2802 = vmatprep.subr.bf16.mxu0 0
      %2803 = vmatpush1.bf16.msra.mxu0 %v2762
      %2804 = vmatprep.subr.bf16.mxu0 0
      %2805 = vmatpush1.bf16.msra.mxu0 %v2763
      %2806 = vmatprep.subr.bf16.mxu0 0
      %2807 = vmatpush1.bf16.msra.mxu0 %v2764
      %2808 = vmatprep.subr.bf16.mxu0 0
      %2809 = vmatpush1.bf16.msra.mxu0 %v2765
      %2810 = vmatprep.subr.bf16.mxu0 0
      %2811 = vmatpush1.bf16.msra.mxu0 %v2766
      %2812 = vmatprep.subr.bf16.mxu0 0
      %2813 = vmatpush1.bf16.msra.mxu0 %v2767
      %2814 = vmatprep.subr.bf16.mxu0 0
      %2815 = vmatpush1.bf16.msra.mxu0 %v2768
      %2816 = vmatprep.subr.bf16.mxu0 0
      %2817 = vmatpush1.bf16.msra.mxu0 %v2769
      %2818 = vmatprep.mubr.bf16.mxu0 %v2650
      %2819 = vmatmul.mubr.bf16.gmra.mrb[0].mxu0 %v2649
      %v2820 = vpop.f32.mrb[0].mxu0
      %v2821 = vadd.f32 %v2688, %v2820
      %v2822 = vpop.f32.mrb[0].mxu0
      %v2823 = vpop.f32.mrb[0].mxu0
      %v2824 = vadd.f32 %v2688, %v2823
      %v2825 = vpop.f32.mrb[0].mxu0
      %2826 = vdwg.mxu0
      %v2827 = vmax.f32 %v2821, 0.0
      %v2828 = vmax.f32 %v2824, 0.0
      %v2829 = vpack.c.bf16 %v2828, %v2827
      %v2830 = vld [vmem:[#allocation15] sm:$0x3]
      %v2831 = vld [vmem:[#allocation17] sm:$0x1]
      %v2833 = vlaneseq
      %v2834 = vshrl.u32 %v2833, 7
      %v2835 = vsub.s32 0, %v2834
      %v2836 = vrot.slane %v2831, %v2835
      %vm2838 = vcmask 31744
      %v2840 = vsel %vm2838, %v2829, 0
      %vm2842 = vcmask 1041408
      %v2844 = vsel %vm2842, %v2830, 0
      %2846 = vmatprep.subr.bf16.mxu0 0
      %2847 = vmatpush1.bf16.msra.mxu0 %v2844
      %2848 = vmatprep.subr.bf16.mxu0 0
      %2849 = vmatpush1.bf16.msra.mxu0 0
      %2850 = vmatprep.subr.bf16.mxu0 0
      %2851 = vmatpush1.bf16.msra.mxu0 0
      %2852 = vmatprep.subr.bf16.mxu0 0
      %2853 = vmatpush1.bf16.msra.mxu0 0
      %2854 = vmatprep.subr.bf16.mxu0 0
      %2855 = vmatpush1.bf16.msra.mxu0 0
      %2856 = vmatprep.subr.bf16.mxu0 0
      %2857 = vmatpush1.bf16.msra.mxu0 0
      %2858 = vmatprep.subr.bf16.mxu0 0
      %2859 = vmatpush1.bf16.msra.mxu0 0
      %2860 = vmatprep.subr.bf16.mxu0 0
      %2861 = vmatpush1.bf16.msra.mxu0 0
      %2862 = vmatprep.subr.bf16.mxu0 0
      %2863 = vmatpush1.bf16.msra.mxu0 0
      %2864 = vmatprep.subr.bf16.mxu0 0
      %2865 = vmatpush1.bf16.msra.mxu0 0
      %2866 = vmatprep.subr.bf16.mxu0 0
      %2867 = vmatpush1.bf16.msra.mxu0 0
      %2868 = vmatprep.subr.bf16.mxu0 0
      %2869 = vmatpush1.bf16.msra.mxu0 0
      %2870 = vmatprep.subr.bf16.mxu0 0
      %2871 = vmatpush1.bf16.msra.mxu0 0
      %2872 = vmatprep.subr.bf16.mxu0 0
      %2873 = vmatpush1.bf16.msra.mxu0 0
      %2874 = vmatprep.subr.bf16.mxu0 0
      %2875 = vmatpush1.bf16.msra.mxu0 0
      %2876 = vmatprep.subr.bf16.mxu0 0
      %2877 = vmatpush1.bf16.msra.mxu0 0
      %2878 = vmatprep.mubr.bf16.mxu0 0
      %2879 = vmatmul.mubr.bf16.gmra.mrb[0].mxu0 %v2840
      %v2880 = vpop.f32.mrb[0].mxu0
      %v2881 = vadd.f32 %v2836, %v2880
      %v2882 = vpop.f32.mrb[0].mxu0
      %v2883 = vpop.f32.mrb[0].mxu0
      %v2884 = vadd.f32 %v2836, %v2883
      %v2885 = vpop.f32.mrb[0].mxu0
      %2886 = vdwg.mxu0
      %v2887 = vsub.f32 0.0, %v2881
      %v2888 = vsub.f32 0.0, %v2884
      %v2889 = vmul.f32 %v2887, 1.442695
      %v2890 = vpow.pop %v2889
      %v2891 = vmul.f32 %v2888, 1.442695
      %v2892 = vpow.pop %v2891
      %v2893 = vadd.f32 %v2890, 1.0
      %v2894 = vadd.f32 %v2892, 1.0
      %v2895 = vrcp.pop %v2893
      %v2896 = vrcp.pop %v2894
      %vm2897 = vcmask 261120
      %2898 = vst.msk [vmem:[#allocation18] sm:$0xff] %vm2897, %v2895
      %2899 = vst.msk [vmem:[#allocation18 + $0x8] sm:$0xff] %vm2897, %v2896
    $region81: #{fcnn_forward.1} parent=1 // pred_fallthru
      _
    // Predicated region
    $region82: #{fcnn_forward.1} parent=1 // pred_check
      _
    $region83: #{fcnn_forward.1} parent=1 // pred_check_branch
      %2901 = sbr.rel (0) target = $region85
    $region84: #{fcnn_forward.1} parent=1 // pred_region
      %s2903 = ssub.s32 256, 256
      %2904 = vsyncadd [#allocation5], %s2903
      %s2905 = sshll.u32 [#allocation18], 4
      %s2906 = int_to_ptr.vmem [resolvable:$true] %s2905
      %2911 = dma.vmem_to_hbm [thread:$0]  %s2906, 256, %s9, [#allocation5], 128, 128, 8
    $region85: #{fcnn_forward.1} parent=1 // pred_fallthru
      _
    // Predicated region
    $region86: #{fcnn_forward.1} parent=1 // pred_check
      _
    $region87: #{fcnn_forward.1} parent=1 // pred_check_branch
      %2913 = sbr.rel (0) target = $region89
    $region88: #{fcnn_forward.1} parent=1 // pred_region
      %2914 = dma.done [#allocation5], 256
    $region89: #{fcnn_forward.1} parent=1 // pred_fallthru
      _
    %2915 = vsyncpa [#allocation4], 1
    %2916 = vsyncpa [#allocation7], 1
    %2917 = vsyncpa [#allocation10], 1
    %2918 = vsyncpa [#allocation13], 1
    %2919 = vsyncpa [#allocation16], 1
    %2920 = vsyncpa [#allocation5], 1

</llo_original>
